<compile_context>
chip_gen: v6e
topology: v6e:2x2x1
jax: 0.10.0
libtpu: 0.0.40
codegen_flags: <defaults>
</compile_context>

<pallas_src>
import functools

import jax
import jax.numpy as jnp
from jax.experimental import pallas as pl
from jax.experimental.pallas import tpu as pltpu


def q_mlp_kernel(s_ref, a_ref, w1s_ref, w1a_ref, b1_ref, w2_ref, b2_ref,
                 w3_ref, b3_ref, o_ref):
    """Fused 3-layer MLP (Linear->ReLU->Linear->ReLU->Linear) on one batch tile.

    All activations are (features, block_b): batch lives on the lane axis, so the
    output is lane-dense.  Matmul operands may be bf16; accumulation, biases and
    elementwise work stay f32 (safe on v5e, accurate everywhere).
    """
    # Layer 1: split-W1 contraction replaces the wrapper-side concat([s, a]).
    h1 = (jnp.dot(w1s_ref[...], s_ref[...], preferred_element_type=jnp.float32)
          + jnp.dot(w1a_ref[...], a_ref[...], preferred_element_type=jnp.float32)
          + b1_ref[...])                                    # (H, block_b) f32
    h1 = jnp.maximum(h1, 0.0)

    # Layer 2: the main (H x H) MXU matmul, f32 accumulate.
    h2 = (jnp.dot(w2_ref[...], h1.astype(w2_ref.dtype),
                  preferred_element_type=jnp.float32)
          + b2_ref[...])
    h2 = jnp.maximum(h2, 0.0)                               # (H, block_b) f32

    # Layer 3 (H -> 1): VPU multiply + sublane reduction instead of an N=1 MXU
    # matmul; the result is already lane-dense (1, block_b).  b3 comes from SMEM.
    q = jnp.sum(w3_ref[...] * h2, axis=0, keepdims=True) + b3_ref[0]
    o_ref[...] = q.astype(o_ref.dtype)


@functools.partial(jax.jit, static_argnames=("block_b", "compute_dtype"))
def q_forward(s, a, params, *, block_b=256, compute_dtype=jnp.float32):
    """Pallas implementation of Q.forward(s, a) = net(cat([s, a], -1)).

    Returns (B, 1) float32, matching the PyTorch module.  `compute_dtype=bf16`
    enables the fast MXU path on v6e/v7x (accumulation stays f32).
    """
    w1s, w1a, b1, w2, b2, w3, b3 = params
    B = s.shape[0]
    Ds, Da, H = w1s.shape[1], w1a.shape[1], w2.shape[0]

    cd = compute_dtype
    # Batch onto the lane axis; cast matmul operands only (weights + activations).
    s_t = s.T.astype(cd)                      # (Ds, B)
    a_t = a.T.astype(cd)                      # (Da, B)
    w1s_c, w1a_c, w2_c = w1s.astype(cd), w1a.astype(cd), w2.astype(cd)

    bb = min(block_b, B)                      # large batch tiles amortize per-step cost
    grid = (pl.cdiv(B, bb),)

    out_t = pl.pallas_call(
        q_mlp_kernel,
        out_shape=jax.ShapeDtypeStruct((1, B), jnp.float32),
        grid_spec=pltpu.PrefetchScalarGridSpec(
            num_scalar_prefetch=0,
            grid=grid,
            in_specs=[
                pl.BlockSpec((Ds, bb), lambda i: (0, i)),   # s^T batch tile
                pl.BlockSpec((Da, bb), lambda i: (0, i)),   # a^T batch tile
                pl.BlockSpec((H, Ds), lambda i: (0, 0)),    # W1[:, :Ds]
                pl.BlockSpec((H, Da), lambda i: (0, 0)),    # W1[:, Ds:]
                pl.BlockSpec((H, 1), lambda i: (0, 0)),     # b1 (column)
                pl.BlockSpec((H, H), lambda i: (0, 0)),     # W2
                pl.BlockSpec((H, 1), lambda i: (0, 0)),     # b2 (column)
                pl.BlockSpec((H, 1), lambda i: (0, 0)),     # w3 (column)
                pl.BlockSpec(memory_space=pltpu.MemorySpace.SMEM),  # b3 scalar
            ],
            out_specs=pl.BlockSpec((1, bb), lambda i: (0, i)),      # lane-dense output
        ),
        compiler_params=pltpu.CompilerParams(
            dimension_semantics=("parallel",),   # >=2 steps -> both TCs on v7x
        ),
    )(s_t, a_t, w1s_c, w1a_c, b1, w2_c, b2, w3, b3)

    return out_t.reshape(B, 1)


def init_q_params(key, state_dim, action_dim, hidden=256):
    """nn.Linear default init U(-1/sqrt(fan_in), 1/sqrt(fan_in)), stored in kernel layout:
    weights as (out_features, in_features), biases as columns, w3 as an (H, 1) column."""
    ks = jax.random.split(key, 6)

    def lin(kw, kb, fan_in, fan_out):
        bound = 1.0 / jnp.sqrt(jnp.float32(fan_in))
        w = jax.random.uniform(kw, (fan_out, fan_in), jnp.float32, -bound, bound)
        b = jax.random.uniform(kb, (fan_out, 1), jnp.float32, -bound, bound)
        return w, b

    d_in = state_dim + action_dim
    w1, b1 = lin(ks[0], ks[1], d_in, hidden)
    w2, b2 = lin(ks[2], ks[3], hidden, hidden)
    w3, b3 = lin(ks[4], ks[5], hidden, 1)
    w1s, w1a = w1[:, :state_dim], w1[:, state_dim:]
    return (w1s, w1a, b1, w2, b2, w3.T, b3.reshape(1))


def q_reference(s, a, params, compute_dtype=jnp.float32):
    """Pure-JAX reference of the PyTorch forward (same operand dtype casts as the kernel)."""
    w1s, w1a, b1, w2, b2, w3, b3 = params
    cd = compute_dtype
    x = jnp.concatenate([s, a], axis=-1).astype(cd)
    w1 = jnp.concatenate([w1s, w1a], axis=-1)
    h1 = jnp.maximum(jnp.dot(x, w1.astype(cd).T,
                             preferred_element_type=jnp.float32) + b1.T, 0.0)
    h2 = jnp.maximum(jnp.dot(h1.astype(cd), w2.astype(cd).T,
                             preferred_element_type=jnp.float32) + b2.T, 0.0)
    return jnp.dot(h2, w3) + b3          # (B, 1)


if __name__ == "__main__":
    # Pendulum-like continuous-control shapes; SAC's canonical replay batch is 256.
    state_dim, action_dim, batch, hidden = 3, 1, 256, 256

    key = jax.random.PRNGKey(0)
    k_params, k_s, k_a = jax.random.split(key, 3)

    params = init_q_params(k_params, state_dim, action_dim, hidden)
    s = jax.random.normal(k_s, (batch, state_dim), jnp.float32)
    a = jax.random.normal(k_a, (batch, action_dim), jnp.float32)

    # f32 path: block_b=128 gives 2 "parallel" grid steps (feeds both TCs on v7x).
    out = q_forward(s, a, params, block_b=128, compute_dtype=jnp.float32)
    out = jax.block_until_ready(out)
    ref = q_reference(s, a, params, compute_dtype=jnp.float32)
    assert out.shape == (batch, 1), out.shape
    assert jnp.allclose(out, ref, atol=1e-4, rtol=1e-4), float(jnp.max(jnp.abs(out - ref)))

    # bf16-operand path (v6e/v7x MXU rate, halved weight traffic), f32 accumulate.
    out_bf16 = q_forward(s, a, params, block_b=128, compute_dtype=jnp.bfloat16)
    out_bf16 = jax.block_until_ready(out_bf16)
    ref_bf16 = q_reference(s, a, params, compute_dtype=jnp.bfloat16)
    assert jnp.allclose(out_bf16, ref_bf16, atol=1e-2, rtol=1e-2), \
        float(jnp.max(jnp.abs(out_bf16 - ref_bf16)))

    print("KERNEL_OK")
</pallas_src>

<mosaic_0001>
module attributes {stable_mosaic.version = 11 : i64} {
  func.func @q_mlp_kernel(%arg0: i32, %arg1: memref<3x128xf32, #tpu.memory_space<vmem>>, %arg2: memref<1x128xf32, #tpu.memory_space<vmem>>, %arg3: memref<256x3xf32, #tpu.memory_space<vmem>>, %arg4: memref<256x1xf32, #tpu.memory_space<vmem>>, %arg5: memref<256x1xf32, #tpu.memory_space<vmem>>, %arg6: memref<256x256xf32, #tpu.memory_space<vmem>>, %arg7: memref<256x1xf32, #tpu.memory_space<vmem>>, %arg8: memref<256x1xf32, #tpu.memory_space<vmem>>, %arg9: memref<1xf32, #tpu.memory_space<smem>>, %arg10: memref<1x128xf32, #tpu.memory_space<vmem>>) attributes {dimension_semantics = [#tpu.dimension_semantics<parallel>], iteration_bounds = array<i64: 2>, scalar_prefetch = 0 : i64, scratch_operands = 0 : i64, tpu.core_type = #tpu.core_type<tc>, window_params = [{transform_indices = @transform_0, window_bounds = array<i64: 3, 128>}, {transform_indices = @transform_1, window_bounds = array<i64: 1, 128>}, {pipeline_mode = #tpu.pipeline_mode<synchronous>, transform_indices = @transform_2, window_bounds = array<i64: 256, 3>}, {pipeline_mode = #tpu.pipeline_mode<synchronous>, transform_indices = @transform_3, window_bounds = array<i64: 256, 1>}, {pipeline_mode = #tpu.pipeline_mode<synchronous>, transform_indices = @transform_4, window_bounds = array<i64: 256, 1>}, {pipeline_mode = #tpu.pipeline_mode<synchronous>, transform_indices = @transform_5, window_bounds = array<i64: 256, 256>}, {pipeline_mode = #tpu.pipeline_mode<synchronous>, transform_indices = @transform_6, window_bounds = array<i64: 256, 1>}, {pipeline_mode = #tpu.pipeline_mode<synchronous>, transform_indices = @transform_7, window_bounds = array<i64: 256, 1>}, {transform_indices = @transform_8, window_bounds = array<i64: 1>}, {transform_indices = @transform_9, window_bounds = array<i64: 1, 128>}]} {
    %c0 = arith.constant 0 : index
    %c0_0 = arith.constant 0 : index
    %0 = vector.load %arg3[%c0, %c0_0] : memref<256x3xf32, #tpu.memory_space<vmem>>, vector<256x3xf32>
    %c0_1 = arith.constant 0 : index
    %c0_2 = arith.constant 0 : index
    %1 = vector.load %arg1[%c0_1, %c0_2] : memref<3x128xf32, #tpu.memory_space<vmem>>, vector<3x128xf32>
    %cst = arith.constant dense<0.000000e+00> : vector<256x128xf32>
    %2 = tpu.matmul %0, %1, %cst {dimension_numbers = #tpu.dot_dimension_numbers<[1], [0], [0], [1], [0, 0, 1, 1], [], []>} : vector<256x3xf32>, vector<3x128xf32>, vector<256x128xf32> -> vector<256x128xf32>
    %c0_3 = arith.constant 0 : index
    %c0_4 = arith.constant 0 : index
    %3 = vector.load %arg4[%c0_3, %c0_4] : memref<256x1xf32, #tpu.memory_space<vmem>>, vector<256x1xf32>
    %c0_5 = arith.constant 0 : index
    %c0_6 = arith.constant 0 : index
    %4 = vector.load %arg2[%c0_5, %c0_6] : memref<1x128xf32, #tpu.memory_space<vmem>>, vector<1x128xf32>
    %cst_7 = arith.constant dense<0.000000e+00> : vector<256x128xf32>
    %5 = tpu.matmul %3, %4, %cst_7 {dimension_numbers = #tpu.dot_dimension_numbers<[1], [0], [0], [1], [0, 0, 1, 1], [], []>} : vector<256x1xf32>, vector<1x128xf32>, vector<256x128xf32> -> vector<256x128xf32>
    %6 = arith.addf %2, %5 : vector<256x128xf32>
    %c0_8 = arith.constant 0 : index
    %c0_9 = arith.constant 0 : index
    %7 = vector.load %arg5[%c0_8, %c0_9] : memref<256x1xf32, #tpu.memory_space<vmem>>, vector<256x1xf32>
    %8 = vector.broadcast %7 : vector<256x1xf32> to vector<256x128xf32>
    %9 = arith.addf %6, %8 : vector<256x128xf32>
    %cst_10 = arith.constant 0.000000e+00 : f32
    %10 = vector.broadcast %cst_10 : f32 to vector<256x128xf32>
    %11 = arith.maximumf %9, %10 : vector<256x128xf32>
    %c0_11 = arith.constant 0 : index
    %c0_12 = arith.constant 0 : index
    %12 = vector.load %arg6[%c0_11, %c0_12] : memref<256x256xf32, #tpu.memory_space<vmem>>, vector<256x256xf32>
    %cst_13 = arith.constant dense<0.000000e+00> : vector<256x128xf32>
    %13 = tpu.matmul %12, %11, %cst_13 {dimension_numbers = #tpu.dot_dimension_numbers<[1], [0], [0], [1], [0, 0, 1, 1], [], []>} : vector<256x256xf32>, vector<256x128xf32>, vector<256x128xf32> -> vector<256x128xf32>
    %c0_14 = arith.constant 0 : index
    %c0_15 = arith.constant 0 : index
    %14 = vector.load %arg7[%c0_14, %c0_15] : memref<256x1xf32, #tpu.memory_space<vmem>>, vector<256x1xf32>
    %15 = vector.broadcast %14 : vector<256x1xf32> to vector<256x128xf32>
    %16 = arith.addf %13, %15 : vector<256x128xf32>
    %cst_16 = arith.constant 0.000000e+00 : f32
    %17 = vector.broadcast %cst_16 : f32 to vector<256x128xf32>
    %18 = arith.maximumf %16, %17 : vector<256x128xf32>
    %c0_17 = arith.constant 0 : index
    %c0_18 = arith.constant 0 : index
    %19 = vector.load %arg8[%c0_17, %c0_18] : memref<256x1xf32, #tpu.memory_space<vmem>>, vector<256x1xf32>
    %20 = vector.broadcast %19 : vector<256x1xf32> to vector<256x128xf32>
    %21 = arith.mulf %20, %18 : vector<256x128xf32>
    %cst_19 = arith.constant dense<0.000000e+00> : vector<128xf32>
    %22 = vector.multi_reduction <add>, %21, %cst_19 [0] : vector<256x128xf32> to vector<128xf32>
    %23 = vector.shape_cast %22 : vector<128xf32> to vector<1x128xf32>
    %c0_20 = arith.constant 0 : index
    %24 = memref.load %arg9[%c0_20] : memref<1xf32, #tpu.memory_space<smem>>
    %25 = vector.broadcast %24 : f32 to vector<1x128xf32>
    %26 = arith.addf %23, %25 : vector<1x128xf32>
    %c0_21 = arith.constant 0 : index
    %c0_22 = arith.constant 0 : index
    %27 = vector.load %arg10[%c0_21, %c0_22] : memref<1x128xf32, #tpu.memory_space<vmem>>, vector<1x128xf32>
    tpu.vector_store %arg10[%c0_21, %c0_22], %26 {strides = array<i32>} : memref<1x128xf32, #tpu.memory_space<vmem>>, vector<1x128xf32>,
    return
  }
  func.func @transform_0(%arg0: i32) -> (i32, i32) {
    %c0_i32 = arith.constant 0 : i32
    %c0_i32_0 = arith.constant 0 : i32
    return %c0_i32, %arg0 : i32, i32
  }
  func.func @transform_1(%arg0: i32) -> (i32, i32) {
    %c0_i32 = arith.constant 0 : i32
    %c0_i32_0 = arith.constant 0 : i32
    return %c0_i32, %arg0 : i32, i32
  }
  func.func @transform_2(%arg0: i32) -> (i32, i32) {
    %c0_i32 = arith.constant 0 : i32
    %c0_i32_0 = arith.constant 0 : i32
    %c0_i32_1 = arith.constant 0 : i32
    return %c0_i32, %c0_i32_0 : i32, i32
  }
  func.func @transform_3(%arg0: i32) -> (i32, i32) {
    %c0_i32 = arith.constant 0 : i32
    %c0_i32_0 = arith.constant 0 : i32
    %c0_i32_1 = arith.constant 0 : i32
    return %c0_i32, %c0_i32_0 : i32, i32
  }
  func.func @transform_4(%arg0: i32) -> (i32, i32) {
    %c0_i32 = arith.constant 0 : i32
    %c0_i32_0 = arith.constant 0 : i32
    %c0_i32_1 = arith.constant 0 : i32
    return %c0_i32, %c0_i32_0 : i32, i32
  }
  func.func @transform_5(%arg0: i32) -> (i32, i32) {
    %c0_i32 = arith.constant 0 : i32
    %c0_i32_0 = arith.constant 0 : i32
    %c0_i32_1 = arith.constant 0 : i32
    return %c0_i32, %c0_i32_0 : i32, i32
  }
  func.func @transform_6(%arg0: i32) -> (i32, i32) {
    %c0_i32 = arith.constant 0 : i32
    %c0_i32_0 = arith.constant 0 : i32
    %c0_i32_1 = arith.constant 0 : i32
    return %c0_i32, %c0_i32_0 : i32, i32
  }
  func.func @transform_7(%arg0: i32) -> (i32, i32) {
    %c0_i32 = arith.constant 0 : i32
    %c0_i32_0 = arith.constant 0 : i32
    %c0_i32_1 = arith.constant 0 : i32
    return %c0_i32, %c0_i32_0 : i32, i32
  }
  func.func @transform_8(%arg0: i32) -> i32 {
    %c0_i32 = arith.constant 0 : i32
    %c0_i32_0 = arith.constant 0 : i32
    return %c0_i32 : i32
  }
  func.func @transform_9(%arg0: i32) -> (i32, i32) {
    %c0_i32 = arith.constant 0 : i32
    %c0_i32_0 = arith.constant 0 : i32
    return %c0_i32, %arg0 : i32, i32
  }
}

</mosaic_0001>

<llo_original>
// kernel: q_forward.1
$region0: #{q_forward.1}
  #allocation0 [shape = 'u32[]', space=smem, size = 0x4, offset = 0x4, fixed_abs, tag = 'smem constant byte address 0x4 - core index']
  #allocation1 [shape = 'u32[144,128]{1,0:T(1,128)}', space=vmem, size = 0x12000, scoped, tag = 'internal scratch']
  #allocation2 [shape = 'f32[1]{0:T(128)S(6)}', space=smem, size = 0x200, scoped, tag = 'scoped memory for q_forward.1']
  %s0 = inlined_call_operand.vmem [shape: f32[3,256], index: 0, kind: input, shape index: {}]
  %s1 = inlined_call_operand.vmem [shape: f32[1,256], index: 1, kind: input, shape index: {}]
  %s2 = inlined_call_operand.vmem [shape: f32[256,3], index: 2, kind: input, shape index: {}]
  %s3 = inlined_call_operand.vmem [shape: f32[256,1], index: 3, kind: input, shape index: {}]
  %s4 = inlined_call_operand.vmem [shape: f32[256,1], index: 4, kind: input, shape index: {}]
  %s5 = inlined_call_operand.vmem [shape: f32[256,256], index: 5, kind: input, shape index: {}]
  %s6 = inlined_call_operand.vmem [shape: f32[256,1], index: 6, kind: input, shape index: {}]
  %s7 = inlined_call_operand.vmem [shape: f32[256,1], index: 7, kind: input, shape index: {}]
  %s8 = inlined_call_operand.<no memory space> [shape: f32[1], index: 8, kind: input, shape index: {}]
  %s9 = inlined_call_operand.hbm [shape: f32[1,256], index: 9, kind: output, shape index: {}]
  %s10 = sld [smem:[#allocation0]]
  $region69: #{q_forward.1} parent=0
    _
  %s12 = ssub.s32 1, %s10
  %s13 = scalar_select 0, %s12, %s10
  %14 = sst [smem:[#allocation2]] %s8
  $region1: #{q_forward.1} parent=0
    #allocation3 [shape = 'u8[1024]{0}', space=vmem, size = 0x400, scoped, tag = 'output window, operand 0']
    #allocation4 [shape = 's32[2]{0}', space=sflag, size = 0x8, scoped, tag = 'scoped memory for q_forward.1']
    %15 = vsyncpa [#allocation4], 0
    %s16 = scalar_lea.sflag [#allocation4], 1
    %17 = vsyncpa %s16, 0
    loop: start=0, step=1, limit=4
    $region2: #{q_forward.1} parent=1 // loop_pre_header
      _
    $region3: #{q_forward.1} parent=1 // loop_header
      %s19 = sphi 0, %s23
      %p20 = scmp.ge.s32.totalorder %s19, 4
      %s29 = sphi 0, %s31
      %s32 = sphi 0, %s29
      %s33 = sphi 0, %s32
      %s49 = sphi 0, %s33
      %s55 = sphi 0, %s57
      %s58 = sphi 0, %s55
      %s59 = sphi 0, %s58
      %s75 = sphi 0, %s59
      %s79 = sphi 0, %s79
      %s81 = sphi 0, %s79
      %s82 = sphi 0, %s81
      %s96 = sphi 0, %s82
      %s100 = sphi 0, %s100
      %s102 = sphi 0, %s100
      %s103 = sphi 0, %s102
      %s117 = sphi 0, %s103
      %s121 = sphi 0, %s121
      %s123 = sphi 0, %s121
      %s124 = sphi 0, %s123
      %s138 = sphi 0, %s124
      %s142 = sphi 0, %s142
      %s144 = sphi 0, %s142
      %s145 = sphi 0, %s144
      %s159 = sphi 0, %s145
      %s163 = sphi 0, %s163
      %s165 = sphi 0, %s163
      %s166 = sphi 0, %s165
      %s180 = sphi 0, %s166
      %s184 = sphi 0, %s184
      %s186 = sphi 0, %s184
      %s187 = sphi 0, %s186
      %s201 = sphi 0, %s187
      %s205 = sphi 0, %s205
      %s207 = sphi 0, %s205
      %s208 = sphi 0, %s207
      %s222 = sphi 0, %s208
      %s228 = sphi 0, %s230
      %s231 = sphi 0, %s228
      %s232 = sphi 0, %s231
      %s248 = sphi 0, %s232
    $region4: #{q_forward.1} parent=1 // loop_header_branch
      %22 = sbr.rel (%p20) target = $region8
    $region5: #{q_forward.1} parent=1 // loop_body
      %s24 = ssub.s32 %s19, 1
      %s25 = ssub.s32 %s19, 2
      %s26 = sadd.s32 %s19, 1
      %s27 = ssub.s32 %s19, %s26
      %p28 = scmp.eq.s32.totalorder %s27, 0
      %s30 = sadd.s32 %s29, 1
      %s31 = scalar_select %p28, %s29, %s30
      %p34 = pneg %p28
      %p35 = scmp.eq.s32.totalorder %s19, 1
      %p36 = por %p34, %p35
      %p37 = scmp.ne.s32.totalorder %s29, %s32
      %p38 = scmp.eq.s32.totalorder %s19, 0
      %p39 = por %p37, %p38
      %p40 = scmp.ne.s32.totalorder %s29, %s32
      %p41 = scmp.eq.s32.totalorder %s24, 1
      %p42 = por %p40, %p41
      %p43 = scmp.ne.s32.totalorder %s32, %s33
      %p44 = scmp.eq.s32.totalorder %s24, 0
      %p45 = por %p43, %p44
      %p46 = scmp.ne.s32.totalorder %s32, %s33
      %p47 = scmp.eq.s32.totalorder %s25, 1
      %p48 = por %p46, %p47
      %p50 = scmp.ne.s32.totalorder %s33, %s49
      %p51 = scmp.eq.s32.totalorder %s25, 0
      %p52 = por %p50, %p51
      %s53 = ssub.s32 %s19, %s26
      %p54 = scmp.eq.s32.totalorder %s53, 0
      %s56 = sadd.s32 %s55, 1
      %s57 = scalar_select %p54, %s55, %s56
      %p60 = pneg %p54
      %p61 = scmp.eq.s32.totalorder %s19, 1
      %p62 = por %p60, %p61
      %p63 = scmp.ne.s32.totalorder %s55, %s58
      %p64 = scmp.eq.s32.totalorder %s19, 0
      %p65 = por %p63, %p64
      %p66 = scmp.ne.s32.totalorder %s55, %s58
      %p67 = scmp.eq.s32.totalorder %s24, 1
      %p68 = por %p66, %p67
      %p69 = scmp.ne.s32.totalorder %s58, %s59
      %p70 = scmp.eq.s32.totalorder %s24, 0
      %p71 = por %p69, %p70
      %p72 = scmp.ne.s32.totalorder %s58, %s59
      %p73 = scmp.eq.s32.totalorder %s25, 1
      %p74 = por %p72, %p73
      %p76 = scmp.ne.s32.totalorder %s59, %s75
      %p77 = scmp.eq.s32.totalorder %s25, 0
      %p78 = por %p76, %p77
      %s80 = sadd.s32 %s79, 1
      %p83 = scmp.eq.s32.totalorder %s19, 1
      %p84 = scmp.ne.s32.totalorder %s79, %s81
      %p85 = scmp.eq.s32.totalorder %s19, 0
      %p86 = por %p84, %p85
      %p87 = scmp.ne.s32.totalorder %s79, %s81
      %p88 = scmp.eq.s32.totalorder %s24, 1
      %p89 = por %p87, %p88
      %p90 = scmp.ne.s32.totalorder %s81, %s82
      %p91 = scmp.eq.s32.totalorder %s24, 0
      %p92 = por %p90, %p91
      %p93 = scmp.ne.s32.totalorder %s81, %s82
      %p94 = scmp.eq.s32.totalorder %s25, 1
      %p95 = por %p93, %p94
      %p97 = scmp.ne.s32.totalorder %s82, %s96
      %p98 = scmp.eq.s32.totalorder %s25, 0
      %p99 = por %p97, %p98
      %s101 = sadd.s32 %s100, 1
      %p104 = scmp.eq.s32.totalorder %s19, 1
      %p105 = scmp.ne.s32.totalorder %s100, %s102
      %p106 = scmp.eq.s32.totalorder %s19, 0
      %p107 = por %p105, %p106
      %p108 = scmp.ne.s32.totalorder %s100, %s102
      %p109 = scmp.eq.s32.totalorder %s24, 1
      %p110 = por %p108, %p109
      %p111 = scmp.ne.s32.totalorder %s102, %s103
      %p112 = scmp.eq.s32.totalorder %s24, 0
      %p113 = por %p111, %p112
      %p114 = scmp.ne.s32.totalorder %s102, %s103
      %p115 = scmp.eq.s32.totalorder %s25, 1
      %p116 = por %p114, %p115
      %p118 = scmp.ne.s32.totalorder %s103, %s117
      %p119 = scmp.eq.s32.totalorder %s25, 0
      %p120 = por %p118, %p119
      %s122 = sadd.s32 %s121, 1
      %p125 = scmp.eq.s32.totalorder %s19, 1
      %p126 = scmp.ne.s32.totalorder %s121, %s123
      %p127 = scmp.eq.s32.totalorder %s19, 0
      %p128 = por %p126, %p127
      %p129 = scmp.ne.s32.totalorder %s121, %s123
      %p130 = scmp.eq.s32.totalorder %s24, 1
      %p131 = por %p129, %p130
      %p132 = scmp.ne.s32.totalorder %s123, %s124
      %p133 = scmp.eq.s32.totalorder %s24, 0
      %p134 = por %p132, %p133
      %p135 = scmp.ne.s32.totalorder %s123, %s124
      %p136 = scmp.eq.s32.totalorder %s25, 1
      %p137 = por %p135, %p136
      %p139 = scmp.ne.s32.totalorder %s124, %s138
      %p140 = scmp.eq.s32.totalorder %s25, 0
      %p141 = por %p139, %p140
      %s143 = sadd.s32 %s142, 1
      %p146 = scmp.eq.s32.totalorder %s19, 1
      %p147 = scmp.ne.s32.totalorder %s142, %s144
      %p148 = scmp.eq.s32.totalorder %s19, 0
      %p149 = por %p147, %p148
      %p150 = scmp.ne.s32.totalorder %s142, %s144
      %p151 = scmp.eq.s32.totalorder %s24, 1
      %p152 = por %p150, %p151
      %p153 = scmp.ne.s32.totalorder %s144, %s145
      %p154 = scmp.eq.s32.totalorder %s24, 0
      %p155 = por %p153, %p154
      %p156 = scmp.ne.s32.totalorder %s144, %s145
      %p157 = scmp.eq.s32.totalorder %s25, 1
      %p158 = por %p156, %p157
      %p160 = scmp.ne.s32.totalorder %s145, %s159
      %p161 = scmp.eq.s32.totalorder %s25, 0
      %p162 = por %p160, %p161
      %s164 = sadd.s32 %s163, 1
      %p167 = scmp.eq.s32.totalorder %s19, 1
      %p168 = scmp.ne.s32.totalorder %s163, %s165
      %p169 = scmp.eq.s32.totalorder %s19, 0
      %p170 = por %p168, %p169
      %p171 = scmp.ne.s32.totalorder %s163, %s165
      %p172 = scmp.eq.s32.totalorder %s24, 1
      %p173 = por %p171, %p172
      %p174 = scmp.ne.s32.totalorder %s165, %s166
      %p175 = scmp.eq.s32.totalorder %s24, 0
      %p176 = por %p174, %p175
      %p177 = scmp.ne.s32.totalorder %s165, %s166
      %p178 = scmp.eq.s32.totalorder %s25, 1
      %p179 = por %p177, %p178
      %p181 = scmp.ne.s32.totalorder %s166, %s180
      %p182 = scmp.eq.s32.totalorder %s25, 0
      %p183 = por %p181, %p182
      %s185 = sadd.s32 %s184, 1
      %p188 = scmp.eq.s32.totalorder %s19, 1
      %p189 = scmp.ne.s32.totalorder %s184, %s186
      %p190 = scmp.eq.s32.totalorder %s19, 0
      %p191 = por %p189, %p190
      %p192 = scmp.ne.s32.totalorder %s184, %s186
      %p193 = scmp.eq.s32.totalorder %s24, 1
      %p194 = por %p192, %p193
      %p195 = scmp.ne.s32.totalorder %s186, %s187
      %p196 = scmp.eq.s32.totalorder %s24, 0
      %p197 = por %p195, %p196
      %p198 = scmp.ne.s32.totalorder %s186, %s187
      %p199 = scmp.eq.s32.totalorder %s25, 1
      %p200 = por %p198, %p199
      %p202 = scmp.ne.s32.totalorder %s187, %s201
      %p203 = scmp.eq.s32.totalorder %s25, 0
      %p204 = por %p202, %p203
      %s206 = sadd.s32 %s205, 1
      %p209 = scmp.eq.s32.totalorder %s19, 1
      %p210 = scmp.ne.s32.totalorder %s205, %s207
      %p211 = scmp.eq.s32.totalorder %s19, 0
      %p212 = por %p210, %p211
      %p213 = scmp.ne.s32.totalorder %s205, %s207
      %p214 = scmp.eq.s32.totalorder %s24, 1
      %p215 = por %p213, %p214
      %p216 = scmp.ne.s32.totalorder %s207, %s208
      %p217 = scmp.eq.s32.totalorder %s24, 0
      %p218 = por %p216, %p217
      %p219 = scmp.ne.s32.totalorder %s207, %s208
      %p220 = scmp.eq.s32.totalorder %s25, 1
      %p221 = por %p219, %p220
      %p223 = scmp.ne.s32.totalorder %s208, %s222
      %p224 = scmp.eq.s32.totalorder %s25, 0
      %p225 = por %p223, %p224
      %s226 = ssub.s32 %s19, %s26
      %p227 = scmp.eq.s32.totalorder %s226, 0
      %s229 = sadd.s32 %s228, 1
      %s230 = scalar_select %p227, %s228, %s229
      %p233 = pneg %p227
      %p234 = scmp.eq.s32.totalorder %s19, 1
      %p235 = por %p233, %p234
      %p236 = scmp.ne.s32.totalorder %s228, %s231
      %p237 = scmp.eq.s32.totalorder %s19, 0
      %p238 = por %p236, %p237
      %p239 = scmp.ne.s32.totalorder %s228, %s231
      %p240 = scmp.eq.s32.totalorder %s24, 1
      %p241 = por %p239, %p240
      %p242 = scmp.ne.s32.totalorder %s231, %s232
      %p243 = scmp.eq.s32.totalorder %s24, 0
      %p244 = por %p242, %p243
      %p245 = scmp.ne.s32.totalorder %s231, %s232
      %p246 = scmp.eq.s32.totalorder %s25, 1
      %p247 = por %p245, %p246
      %p249 = scmp.ne.s32.totalorder %s232, %s248
      %p250 = scmp.eq.s32.totalorder %s25, 0
      %p251 = por %p249, %p250
      %p252 = scmp.le.s32.totalorder 1, %s19
      %p253 = scmp.lt.s32.totalorder %s19, 3
      %p254 = pnand %p252, %p253
      %p255 = pneg %p254
      // Predicated region
      $region9: #{q_forward.1} parent=5 // pred_check
        _
      $region10: #{q_forward.1} parent=5 // pred_check_branch
        %257 = sbr.rel (%p254) target = $region12
      $region11: #{q_forward.1} parent=5 // pred_region
        %s258 = ssub.s32 %s19, 1
        // Predicated region
        $region13: #{q_forward.1} parent=11 // pred_check
          %p259 = pneg %p92
        $region14: #{q_forward.1} parent=11 // pred_check_branch
          %261 = sbr.rel (%p259) target = $region16
        $region15: #{q_forward.1} parent=11 // pred_region
          _
        $region16: #{q_forward.1} parent=11 // pred_fallthru
          _
        // Predicated region
        $region17: #{q_forward.1} parent=11 // pred_check
          %p262 = pneg %p113
        $region18: #{q_forward.1} parent=11 // pred_check_branch
          %264 = sbr.rel (%p262) target = $region20
        $region19: #{q_forward.1} parent=11 // pred_region
          _
        $region20: #{q_forward.1} parent=11 // pred_fallthru
          _
        // Predicated region
        $region21: #{q_forward.1} parent=11 // pred_check
          %p265 = pneg %p134
        $region22: #{q_forward.1} parent=11 // pred_check_branch
          %267 = sbr.rel (%p265) target = $region24
        $region23: #{q_forward.1} parent=11 // pred_region
          _
        $region24: #{q_forward.1} parent=11 // pred_fallthru
          _
        // Predicated region
        $region25: #{q_forward.1} parent=11 // pred_check
          %p268 = pneg %p155
        $region26: #{q_forward.1} parent=11 // pred_check_branch
          %270 = sbr.rel (%p268) target = $region28
        $region27: #{q_forward.1} parent=11 // pred_region
          _
        $region28: #{q_forward.1} parent=11 // pred_fallthru
          _
        // Predicated region
        $region29: #{q_forward.1} parent=11 // pred_check
          %p271 = pneg %p176
        $region30: #{q_forward.1} parent=11 // pred_check_branch
          %273 = sbr.rel (%p271) target = $region32
        $region31: #{q_forward.1} parent=11 // pred_region
          _
        $region32: #{q_forward.1} parent=11 // pred_fallthru
          _
        // Predicated region
        $region33: #{q_forward.1} parent=11 // pred_check
          %p274 = pneg %p197
        $region34: #{q_forward.1} parent=11 // pred_check_branch
          %276 = sbr.rel (%p274) target = $region36
        $region35: #{q_forward.1} parent=11 // pred_region
          _
        $region36: #{q_forward.1} parent=11 // pred_fallthru
          _
        // Predicated region
        $region37: #{q_forward.1} parent=11 // pred_check
          %p277 = pneg %p218
        $region38: #{q_forward.1} parent=11 // pred_check_branch
          %279 = sbr.rel (%p277) target = $region40
        $region39: #{q_forward.1} parent=11 // pred_region
          _
        $region40: #{q_forward.1} parent=11 // pred_fallthru
          _
      $region12: #{q_forward.1} parent=5 // pred_fallthru
        _
      %p280 = scmp.lt.s32.totalorder %s19, 2
      // Predicated region
      $region41: #{q_forward.1} parent=5 // pred_check
        %p281 = pneg %p280
      $region42: #{q_forward.1} parent=5 // pred_check_branch
        %283 = sbr.rel (%p281) target = $region44
      $region43: #{q_forward.1} parent=5 // pred_region
        // Predicated region
        $region45: #{q_forward.1} parent=43 // pred_check
          %p284 = pneg %p39
        $region46: #{q_forward.1} parent=43 // pred_check_branch
          %286 = sbr.rel (%p284) target = $region48
        $region47: #{q_forward.1} parent=43 // pred_region
          %p287 = scmp.lt.s32.totalorder %s19, 1
          %s288 = scalar_select %p287, %s19, 1
          %s289 = smul.addr %s288, 4
          %s290 = scalar_lea.vmem %s0, %s289
        $region48: #{q_forward.1} parent=43 // pred_fallthru
          _
        // Predicated region
        $region49: #{q_forward.1} parent=43 // pred_check
          %p291 = pneg %p65
        $region50: #{q_forward.1} parent=43 // pred_check_branch
          %293 = sbr.rel (%p291) target = $region52
        $region51: #{q_forward.1} parent=43 // pred_region
          %p294 = scmp.lt.s32.totalorder %s19, 1
          %s295 = scalar_select %p294, %s19, 1
          %s296 = scalar_lea.vmem %s1, %s295
        $region52: #{q_forward.1} parent=43 // pred_fallthru
          _
      $region44: #{q_forward.1} parent=5 // pred_fallthru
        _
      %p297 = scmp.le.s32.totalorder 1, %s19
      %p298 = scmp.lt.s32.totalorder %s19, 3
      %p299 = pnand %p297, %p298
      %p300 = pneg %p299
      // Predicated region
      $region53: #{q_forward.1} parent=5 // pred_check
        _
      $region54: #{q_forward.1} parent=5 // pred_check_branch
        %302 = sbr.rel (%p299) target = $region56
      $region55: #{q_forward.1} parent=5 // pred_region
        %s303 = ssub.s32 %s19, 1
        %p304 = scmp.lt.s32.totalorder %s24, 1
        %s305 = scalar_select %p304, %s24, 1
        %s306 = smul.addr %s305, 4
        %s307 = scalar_lea.vmem %s0, %s306
        %p308 = pneg %p45
        %p309 = pneg %p42
        %p310 = scmp.lt.s32.totalorder %s24, 1
        %s311 = scalar_select %p310, %s24, 1
        %s312 = scalar_lea.vmem %s1, %s311
        %p313 = pneg %p71
        %p314 = pneg %p68
        %p315 = pneg %p92
        %p316 = pneg %p89
        %p317 = pneg %p113
        %p318 = pneg %p110
        %p319 = pneg %p134
        %p320 = pneg %p131
        %p321 = pneg %p155
        %p322 = pneg %p152
        %p323 = pneg %p176
        %p324 = pneg %p173
        %p325 = pneg %p197
        %p326 = pneg %p194
        %p327 = pneg %p218
        %p328 = pneg %p215
        %p329 = pneg %p244
        %p330 = pneg %p241
        %s331 = sand.u32 %s231, 1
        %s332 = scalar_lea.sflag [#allocation4], %s331
        %s333 = sand.u32 %s231, 1
        %s334 = scalar_lea.vmem [#allocation3], %s333
        %p335 = scmp.lt.s32.totalorder %s24, 1
        %s336 = scalar_select %p335, %s24, 1
        %s337 = smul.addr %s336, 4
        %s338 = scalar_lea.vmem %s0, %s337
        %p339 = scmp.lt.s32.totalorder %s24, 1
        %s340 = scalar_select %p339, %s24, 1
        %s341 = scalar_lea.vmem %s1, %s340
        %v342 = vld [vmem:[%s2] sm:$0xff]
        %v343 = vld [vmem:[%s2 + $0x8] sm:$0xff]
        %v344 = vld [vmem:[%s2 + $0x10] sm:$0xff]
        %v345 = vld [vmem:[%s2 + $0x18] sm:$0xff]
        %v346 = vld [vmem:[%s2 + $0x20] sm:$0xff]
        %v347 = vld [vmem:[%s2 + $0x28] sm:$0xff]
        %v348 = vld [vmem:[%s2 + $0x30] sm:$0xff]
        %v349 = vld [vmem:[%s2 + $0x38] sm:$0xff]
        %v350 = vld [vmem:[%s2 + $0x40] sm:$0xff]
        %v351 = vld [vmem:[%s2 + $0x48] sm:$0xff]
        %v352 = vld [vmem:[%s2 + $0x50] sm:$0xff]
        %v353 = vld [vmem:[%s2 + $0x58] sm:$0xff]
        %v354 = vld [vmem:[%s2 + $0x60] sm:$0xff]
        %v355 = vld [vmem:[%s2 + $0x68] sm:$0xff]
        %v356 = vld [vmem:[%s2 + $0x70] sm:$0xff]
        %v357 = vld [vmem:[%s2 + $0x78] sm:$0xff]
        %v358 = vld [vmem:[%s2 + $0x80] sm:$0xff]
        %v359 = vld [vmem:[%s2 + $0x88] sm:$0xff]
        %v360 = vld [vmem:[%s2 + $0x90] sm:$0xff]
        %v361 = vld [vmem:[%s2 + $0x98] sm:$0xff]
        %v362 = vld [vmem:[%s2 + $0xa0] sm:$0xff]
        %v363 = vld [vmem:[%s2 + $0xa8] sm:$0xff]
        %v364 = vld [vmem:[%s2 + $0xb0] sm:$0xff]
        %v365 = vld [vmem:[%s2 + $0xb8] sm:$0xff]
        %v366 = vld [vmem:[%s2 + $0xc0] sm:$0xff]
        %v367 = vld [vmem:[%s2 + $0xc8] sm:$0xff]
        %v368 = vld [vmem:[%s2 + $0xd0] sm:$0xff]
        %v369 = vld [vmem:[%s2 + $0xd8] sm:$0xff]
        %v370 = vld [vmem:[%s2 + $0xe0] sm:$0xff]
        %v371 = vld [vmem:[%s2 + $0xe8] sm:$0xff]
        %v372 = vld [vmem:[%s2 + $0xf0] sm:$0xff]
        %v373 = vld [vmem:[%s2 + $0xf8] sm:$0xff]
        %v374 = vld [vmem:[%s338] sm:$0x7]
        %v375 = vld [vmem:[%s3] sm:$0xff]
        %v376 = vld [vmem:[%s3 + $0x8] sm:$0xff]
        %v377 = vld [vmem:[%s3 + $0x10] sm:$0xff]
        %v378 = vld [vmem:[%s3 + $0x18] sm:$0xff]
        %v379 = vld [vmem:[%s3 + $0x20] sm:$0xff]
        %v380 = vld [vmem:[%s3 + $0x28] sm:$0xff]
        %v381 = vld [vmem:[%s3 + $0x30] sm:$0xff]
        %v382 = vld [vmem:[%s3 + $0x38] sm:$0xff]
        %v383 = vld [vmem:[%s3 + $0x40] sm:$0xff]
        %v384 = vld [vmem:[%s3 + $0x48] sm:$0xff]
        %v385 = vld [vmem:[%s3 + $0x50] sm:$0xff]
        %v386 = vld [vmem:[%s3 + $0x58] sm:$0xff]
        %v387 = vld [vmem:[%s3 + $0x60] sm:$0xff]
        %v388 = vld [vmem:[%s3 + $0x68] sm:$0xff]
        %v389 = vld [vmem:[%s3 + $0x70] sm:$0xff]
        %v390 = vld [vmem:[%s3 + $0x78] sm:$0xff]
        %v391 = vld [vmem:[%s3 + $0x80] sm:$0xff]
        %v392 = vld [vmem:[%s3 + $0x88] sm:$0xff]
        %v393 = vld [vmem:[%s3 + $0x90] sm:$0xff]
        %v394 = vld [vmem:[%s3 + $0x98] sm:$0xff]
        %v395 = vld [vmem:[%s3 + $0xa0] sm:$0xff]
        %v396 = vld [vmem:[%s3 + $0xa8] sm:$0xff]
        %v397 = vld [vmem:[%s3 + $0xb0] sm:$0xff]
        %v398 = vld [vmem:[%s3 + $0xb8] sm:$0xff]
        %v399 = vld [vmem:[%s3 + $0xc0] sm:$0xff]
        %v400 = vld [vmem:[%s3 + $0xc8] sm:$0xff]
        %v401 = vld [vmem:[%s3 + $0xd0] sm:$0xff]
        %v402 = vld [vmem:[%s3 + $0xd8] sm:$0xff]
        %v403 = vld [vmem:[%s3 + $0xe0] sm:$0xff]
        %v404 = vld [vmem:[%s3 + $0xe8] sm:$0xff]
        %v405 = vld [vmem:[%s3 + $0xf0] sm:$0xff]
        %v406 = vld [vmem:[%s3 + $0xf8] sm:$0xff]
        %v407 = vld [vmem:[%s341] sm:$0x1]
        %vm408 = vcmask 7168
        %v410 = vsel %vm408, %v375, 0
        %v413 = vsel %vm408, %v376, 0
        %v416 = vsel %vm408, %v377, 0
        %v419 = vsel %vm408, %v378, 0
        %v422 = vsel %vm408, %v379, 0
        %v425 = vsel %vm408, %v380, 0
        %v428 = vsel %vm408, %v381, 0
        %v431 = vsel %vm408, %v382, 0
        %v434 = vsel %vm408, %v383, 0
        %v437 = vsel %vm408, %v384, 0
        %v440 = vsel %vm408, %v385, 0
        %v443 = vsel %vm408, %v386, 0
        %v446 = vsel %vm408, %v387, 0
        %v449 = vsel %vm408, %v388, 0
        %v452 = vsel %vm408, %v389, 0
        %v455 = vsel %vm408, %v390, 0
        %v458 = vsel %vm408, %v391, 0
        %v461 = vsel %vm408, %v392, 0
        %v464 = vsel %vm408, %v393, 0
        %v467 = vsel %vm408, %v394, 0
        %v470 = vsel %vm408, %v395, 0
        %v473 = vsel %vm408, %v396, 0
        %v476 = vsel %vm408, %v397, 0
        %v479 = vsel %vm408, %v398, 0
        %v482 = vsel %vm408, %v399, 0
        %v485 = vsel %vm408, %v400, 0
        %v488 = vsel %vm408, %v401, 0
        %v491 = vsel %vm408, %v402, 0
        %v494 = vsel %vm408, %v403, 0
        %v497 = vsel %vm408, %v404, 0
        %v500 = vsel %vm408, %v405, 0
        %v503 = vsel %vm408, %v406, 0
        %vm505 = vcmask 1040384
        %v507 = vsel %vm505, %v407, 0
        %509 = vmatprep.subr.mxu0 0.0
        %510 = vmatpush1.msra.mxu0 0.0
        %511 = vmatprep.subr.mxu0 0.0
        %512 = vmatpush1.msra.mxu0 0.0
        %513 = vmatprep.subr.mxu0 0.0
        %514 = vmatpush1.msra.mxu0 0.0
        %515 = vmatprep.subr.mxu0 0.0
        %516 = vmatpush1.msra.mxu0 0.0
        %517 = vmatprep.subr.mxu0 0.0
        %518 = vmatpush1.msra.mxu0 0.0
        %519 = vmatprep.subr.mxu0 0.0
        %520 = vmatpush1.msra.mxu0 0.0
        %521 = vmatprep.subr.mxu0 0.0
        %522 = vmatpush1.msra.mxu0 0.0
        %523 = vmatprep.subr.mxu0 0.0
        %524 = vmatpush1.msra.mxu0 0.0
        %525 = vmatprep.subr.mxu0 0.0
        %526 = vmatpush1.msra.mxu0 0.0
        %527 = vmatprep.subr.mxu0 0.0
        %528 = vmatpush1.msra.mxu0 0.0
        %529 = vmatprep.subr.mxu0 0.0
        %530 = vmatpush1.msra.mxu0 0.0
        %531 = vmatprep.subr.mxu0 0.0
        %532 = vmatpush1.msra.mxu0 0.0
        %533 = vmatprep.subr.mxu0 0.0
        %534 = vmatpush1.msra.mxu0 0.0
        %535 = vmatprep.subr.mxu0 0.0
        %536 = vmatpush1.msra.mxu0 0.0
        %537 = vmatprep.subr.mxu0 0.0
        %538 = vmatpush1.msra.mxu0 0.0
        %539 = vmatprep.subr.mxu0 0.0
        %540 = vmatpush1.msra.mxu0 %v507
        %541 = vmatprep.subr.mxu0 0.0
        %542 = vmatpush2.msra.mxu0 0.0
        %543 = vmatprep.subr.mxu0 0.0
        %544 = vmatpush2.msra.mxu0 0.0
        %545 = vmatprep.subr.mxu0 0.0
        %546 = vmatpush2.msra.mxu0 0.0
        %547 = vmatprep.subr.mxu0 0.0
        %548 = vmatpush2.msra.mxu0 0.0
        %549 = vmatprep.subr.mxu0 0.0
        %550 = vmatpush2.msra.mxu0 0.0
        %551 = vmatprep.subr.mxu0 0.0
        %552 = vmatpush2.msra.mxu0 0.0
        %553 = vmatprep.subr.mxu0 0.0
        %554 = vmatpush2.msra.mxu0 0.0
        %555 = vmatprep.subr.mxu0 0.0
        %556 = vmatpush2.msra.mxu0 0.0
        %557 = vmatprep.subr.mxu0 0.0
        %558 = vmatpush2.msra.mxu0 0.0
        %559 = vmatprep.subr.mxu0 0.0
        %560 = vmatpush2.msra.mxu0 0.0
        %561 = vmatprep.subr.mxu0 0.0
        %562 = vmatpush2.msra.mxu0 0.0
        %563 = vmatprep.subr.mxu0 0.0
        %564 = vmatpush2.msra.mxu0 0.0
        %565 = vmatprep.subr.mxu0 0.0
        %566 = vmatpush2.msra.mxu0 0.0
        %567 = vmatprep.subr.mxu0 0.0
        %568 = vmatpush2.msra.mxu0 0.0
        %569 = vmatprep.subr.mxu0 0.0
        %570 = vmatpush2.msra.mxu0 0.0
        %571 = vmatprep.subr.mxu0 0.0
        %572 = vmatpush2.msra.mxu0 0.0
        %573 = vmatprep.mubr.f32.mxu0 0.0
        %574 = vmatmul.mubr.f32.gmra.mxu0 %v410
        %v575 = vpop.f32.mrf.mxu0
        %v576 = vadd.f32 0.0, %v575
        %v577 = vpop.f32.mrf.mxu0
        %578 = vmatprep.mubr.f32.mxu0 0.0
        %579 = vmatmul.mubr.f32.gmra.mxu0 %v413
        %v580 = vpop.f32.mrf.mxu0
        %v581 = vadd.f32 0.0, %v580
        %v582 = vpop.f32.mrf.mxu0
        %583 = vmatprep.mubr.f32.mxu0 0.0
        %584 = vmatmul.mubr.f32.gmra.mxu0 %v416
        %v585 = vpop.f32.mrf.mxu0
        %v586 = vadd.f32 0.0, %v585
        %v587 = vpop.f32.mrf.mxu0
        %588 = vmatprep.mubr.f32.mxu0 0.0
        %589 = vmatmul.mubr.f32.gmra.mxu0 %v419
        %v590 = vpop.f32.mrf.mxu0
        %v591 = vadd.f32 0.0, %v590
        %v592 = vpop.f32.mrf.mxu0
        %593 = vmatprep.mubr.f32.mxu0 0.0
        %594 = vmatmul.mubr.f32.gmra.mxu0 %v422
        %v595 = vpop.f32.mrf.mxu0
        %v596 = vadd.f32 0.0, %v595
        %v597 = vpop.f32.mrf.mxu0
        %598 = vmatprep.mubr.f32.mxu0 0.0
        %599 = vmatmul.mubr.f32.gmra.mxu0 %v425
        %v600 = vpop.f32.mrf.mxu0
        %v601 = vadd.f32 0.0, %v600
        %v602 = vpop.f32.mrf.mxu0
        %603 = vmatprep.mubr.f32.mxu0 0.0
        %604 = vmatmul.mubr.f32.gmra.mxu0 %v428
        %v605 = vpop.f32.mrf.mxu0
        %v606 = vadd.f32 0.0, %v605
        %v607 = vpop.f32.mrf.mxu0
        %608 = vmatprep.mubr.f32.mxu0 0.0
        %609 = vmatmul.mubr.f32.gmra.mxu0 %v431
        %v610 = vpop.f32.mrf.mxu0
        %v611 = vadd.f32 0.0, %v610
        %v612 = vpop.f32.mrf.mxu0
        %613 = vmatprep.mubr.f32.mxu0 0.0
        %614 = vmatmul.mubr.f32.gmra.mxu0 %v434
        %v615 = vpop.f32.mrf.mxu0
        %v616 = vadd.f32 0.0, %v615
        %v617 = vpop.f32.mrf.mxu0
        %618 = vmatprep.mubr.f32.mxu0 0.0
        %619 = vmatmul.mubr.f32.gmra.mxu0 %v437
        %v620 = vpop.f32.mrf.mxu0
        %v621 = vadd.f32 0.0, %v620
        %v622 = vpop.f32.mrf.mxu0
        %623 = vmatprep.mubr.f32.mxu0 0.0
        %624 = vmatmul.mubr.f32.gmra.mxu0 %v440
        %v625 = vpop.f32.mrf.mxu0
        %v626 = vadd.f32 0.0, %v625
        %v627 = vpop.f32.mrf.mxu0
        %628 = vmatprep.mubr.f32.mxu0 0.0
        %629 = vmatmul.mubr.f32.gmra.mxu0 %v443
        %v630 = vpop.f32.mrf.mxu0
        %v631 = vadd.f32 0.0, %v630
        %v632 = vpop.f32.mrf.mxu0
        %633 = vmatprep.mubr.f32.mxu0 0.0
        %634 = vmatmul.mubr.f32.gmra.mxu0 %v446
        %v635 = vpop.f32.mrf.mxu0
        %v636 = vadd.f32 0.0, %v635
        %v637 = vpop.f32.mrf.mxu0
        %638 = vmatprep.mubr.f32.mxu0 0.0
        %639 = vmatmul.mubr.f32.gmra.mxu0 %v449
        %v640 = vpop.f32.mrf.mxu0
        %v641 = vadd.f32 0.0, %v640
        %v642 = vpop.f32.mrf.mxu0
        %643 = vmatprep.mubr.f32.mxu0 0.0
        %644 = vmatmul.mubr.f32.gmra.mxu0 %v452
        %v645 = vpop.f32.mrf.mxu0
        %v646 = vadd.f32 0.0, %v645
        %v647 = vpop.f32.mrf.mxu0
        %648 = vmatprep.mubr.f32.mxu0 0.0
        %649 = vmatmul.mubr.f32.gmra.mxu0 %v455
        %v650 = vpop.f32.mrf.mxu0
        %v651 = vadd.f32 0.0, %v650
        %v652 = vpop.f32.mrf.mxu0
        %653 = vmatprep.mubr.f32.mxu0 0.0
        %654 = vmatmul.mubr.f32.gmra.mxu0 %v458
        %v655 = vpop.f32.mrf.mxu0
        %v656 = vadd.f32 0.0, %v655
        %v657 = vpop.f32.mrf.mxu0
        %658 = vmatprep.mubr.f32.mxu0 0.0
        %659 = vmatmul.mubr.f32.gmra.mxu0 %v461
        %v660 = vpop.f32.mrf.mxu0
        %v661 = vadd.f32 0.0, %v660
        %v662 = vpop.f32.mrf.mxu0
        %663 = vmatprep.mubr.f32.mxu0 0.0
        %664 = vmatmul.mubr.f32.gmra.mxu0 %v464
        %v665 = vpop.f32.mrf.mxu0
        %v666 = vadd.f32 0.0, %v665
        %v667 = vpop.f32.mrf.mxu0
        %668 = vmatprep.mubr.f32.mxu0 0.0
        %669 = vmatmul.mubr.f32.gmra.mxu0 %v467
        %v670 = vpop.f32.mrf.mxu0
        %v671 = vadd.f32 0.0, %v670
        %v672 = vpop.f32.mrf.mxu0
        %673 = vmatprep.mubr.f32.mxu0 0.0
        %674 = vmatmul.mubr.f32.gmra.mxu0 %v470
        %v675 = vpop.f32.mrf.mxu0
        %v676 = vadd.f32 0.0, %v675
        %v677 = vpop.f32.mrf.mxu0
        %678 = vmatprep.mubr.f32.mxu0 0.0
        %679 = vmatmul.mubr.f32.gmra.mxu0 %v473
        %v680 = vpop.f32.mrf.mxu0
        %v681 = vadd.f32 0.0, %v680
        %v682 = vpop.f32.mrf.mxu0
        %683 = vmatprep.mubr.f32.mxu0 0.0
        %684 = vmatmul.mubr.f32.gmra.mxu0 %v476
        %v685 = vpop.f32.mrf.mxu0
        %v686 = vadd.f32 0.0, %v685
        %v687 = vpop.f32.mrf.mxu0
        %688 = vmatprep.mubr.f32.mxu0 0.0
        %689 = vmatmul.mubr.f32.gmra.mxu0 %v479
        %v690 = vpop.f32.mrf.mxu0
        %v691 = vadd.f32 0.0, %v690
        %v692 = vpop.f32.mrf.mxu0
        %693 = vmatprep.mubr.f32.mxu0 0.0
        %694 = vmatmul.mubr.f32.gmra.mxu0 %v482
        %v695 = vpop.f32.mrf.mxu0
        %v696 = vadd.f32 0.0, %v695
        %v697 = vpop.f32.mrf.mxu0
        %698 = vmatprep.mubr.f32.mxu0 0.0
        %699 = vmatmul.mubr.f32.gmra.mxu0 %v485
        %v700 = vpop.f32.mrf.mxu0
        %v701 = vadd.f32 0.0, %v700
        %v702 = vpop.f32.mrf.mxu0
        %703 = vmatprep.mubr.f32.mxu0 0.0
        %704 = vmatmul.mubr.f32.gmra.mxu0 %v488
        %v705 = vpop.f32.mrf.mxu0
        %v706 = vadd.f32 0.0, %v705
        %v707 = vpop.f32.mrf.mxu0
        %708 = vmatprep.mubr.f32.mxu0 0.0
        %709 = vmatmul.mubr.f32.gmra.mxu0 %v491
        %v710 = vpop.f32.mrf.mxu0
        %v711 = vadd.f32 0.0, %v710
        %v712 = vpop.f32.mrf.mxu0
        %713 = vmatprep.mubr.f32.mxu0 0.0
        %714 = vmatmul.mubr.f32.gmra.mxu0 %v494
        %v715 = vpop.f32.mrf.mxu0
        %v716 = vadd.f32 0.0, %v715
        %v717 = vpop.f32.mrf.mxu0
        %718 = vmatprep.mubr.f32.mxu0 0.0
        %719 = vmatmul.mubr.f32.gmra.mxu0 %v497
        %v720 = vpop.f32.mrf.mxu0
        %v721 = vadd.f32 0.0, %v720
        %v722 = vpop.f32.mrf.mxu0
        %723 = vmatprep.mubr.f32.mxu0 0.0
        %724 = vmatmul.mubr.f32.gmra.mxu0 %v500
        %v725 = vpop.f32.mrf.mxu0
        %v726 = vadd.f32 0.0, %v725
        %v727 = vpop.f32.mrf.mxu0
        %728 = vmatprep.mubr.f32.mxu0 0.0
        %729 = vmatmul.mubr.f32.gmra.mxu0 %v503
        %v730 = vpop.f32.mrf.mxu0
        %v731 = vadd.f32 0.0, %v730
        %v732 = vpop.f32.mrf.mxu0
        %733 = vdwg.mxu0
        %vm734 = vcmask 23552
        %v736 = vsel %vm734, %v342, 0
        %v739 = vsel %vm734, %v343, 0
        %v742 = vsel %vm734, %v344, 0
        %v745 = vsel %vm734, %v345, 0
        %v748 = vsel %vm734, %v346, 0
        %v751 = vsel %vm734, %v347, 0
        %v754 = vsel %vm734, %v348, 0
        %v757 = vsel %vm734, %v349, 0
        %v760 = vsel %vm734, %v350, 0
        %v763 = vsel %vm734, %v351, 0
        %v766 = vsel %vm734, %v352, 0
        %v769 = vsel %vm734, %v353, 0
        %v772 = vsel %vm734, %v354, 0
        %v775 = vsel %vm734, %v355, 0
        %v778 = vsel %vm734, %v356, 0
        %v781 = vsel %vm734, %v357, 0
        %v784 = vsel %vm734, %v358, 0
        %v787 = vsel %vm734, %v359, 0
        %v790 = vsel %vm734, %v360, 0
        %v793 = vsel %vm734, %v361, 0
        %v796 = vsel %vm734, %v362, 0
        %v799 = vsel %vm734, %v363, 0
        %v802 = vsel %vm734, %v364, 0
        %v805 = vsel %vm734, %v365, 0
        %v808 = vsel %vm734, %v366, 0
        %v811 = vsel %vm734, %v367, 0
        %v814 = vsel %vm734, %v368, 0
        %v817 = vsel %vm734, %v369, 0
        %v820 = vsel %vm734, %v370, 0
        %v823 = vsel %vm734, %v371, 0
        %v826 = vsel %vm734, %v372, 0
        %v829 = vsel %vm734, %v373, 0
        %vm831 = vcmask 1042432
        %v833 = vsel %vm831, %v374, 0
        %835 = vmatprep.subr.mxu0 0.0
        %836 = vmatpush1.msra.mxu0 0.0
        %837 = vmatprep.subr.mxu0 0.0
        %838 = vmatpush1.msra.mxu0 0.0
        %839 = vmatprep.subr.mxu0 0.0
        %840 = vmatpush1.msra.mxu0 0.0
        %841 = vmatprep.subr.mxu0 0.0
        %842 = vmatpush1.msra.mxu0 0.0
        %843 = vmatprep.subr.mxu0 0.0
        %844 = vmatpush1.msra.mxu0 0.0
        %845 = vmatprep.subr.mxu0 0.0
        %846 = vmatpush1.msra.mxu0 0.0
        %847 = vmatprep.subr.mxu0 0.0
        %848 = vmatpush1.msra.mxu0 0.0
        %849 = vmatprep.subr.mxu0 0.0
        %850 = vmatpush1.msra.mxu0 0.0
        %851 = vmatprep.subr.mxu0 0.0
        %852 = vmatpush1.msra.mxu0 0.0
        %853 = vmatprep.subr.mxu0 0.0
        %854 = vmatpush1.msra.mxu0 0.0
        %855 = vmatprep.subr.mxu0 0.0
        %856 = vmatpush1.msra.mxu0 0.0
        %857 = vmatprep.subr.mxu0 0.0
        %858 = vmatpush1.msra.mxu0 0.0
        %859 = vmatprep.subr.mxu0 0.0
        %860 = vmatpush1.msra.mxu0 0.0
        %861 = vmatprep.subr.mxu0 0.0
        %862 = vmatpush1.msra.mxu0 0.0
        %863 = vmatprep.subr.mxu0 0.0
        %864 = vmatpush1.msra.mxu0 0.0
        %865 = vmatprep.subr.mxu0 0.0
        %866 = vmatpush1.msra.mxu0 %v833
        %867 = vmatprep.subr.mxu0 0.0
        %868 = vmatpush2.msra.mxu0 0.0
        %869 = vmatprep.subr.mxu0 0.0
        %870 = vmatpush2.msra.mxu0 0.0
        %871 = vmatprep.subr.mxu0 0.0
        %872 = vmatpush2.msra.mxu0 0.0
        %873 = vmatprep.subr.mxu0 0.0
        %874 = vmatpush2.msra.mxu0 0.0
        %875 = vmatprep.subr.mxu0 0.0
        %876 = vmatpush2.msra.mxu0 0.0
        %877 = vmatprep.subr.mxu0 0.0
        %878 = vmatpush2.msra.mxu0 0.0
        %879 = vmatprep.subr.mxu0 0.0
        %880 = vmatpush2.msra.mxu0 0.0
        %881 = vmatprep.subr.mxu0 0.0
        %882 = vmatpush2.msra.mxu0 0.0
        %883 = vmatprep.subr.mxu0 0.0
        %884 = vmatpush2.msra.mxu0 0.0
        %885 = vmatprep.subr.mxu0 0.0
        %886 = vmatpush2.msra.mxu0 0.0
        %887 = vmatprep.subr.mxu0 0.0
        %888 = vmatpush2.msra.mxu0 0.0
        %889 = vmatprep.subr.mxu0 0.0
        %890 = vmatpush2.msra.mxu0 0.0
        %891 = vmatprep.subr.mxu0 0.0
        %892 = vmatpush2.msra.mxu0 0.0
        %893 = vmatprep.subr.mxu0 0.0
        %894 = vmatpush2.msra.mxu0 0.0
        %895 = vmatprep.subr.mxu0 0.0
        %896 = vmatpush2.msra.mxu0 0.0
        %897 = vmatprep.subr.mxu0 0.0
        %898 = vmatpush2.msra.mxu0 0.0
        %899 = vmatprep.mubr.f32.mxu0 0.0
        %900 = vmatmul.mubr.f32.gmra.mxu0 %v736
        %v901 = vpop.f32.mrf.mxu0
        %v902 = vadd.f32 %v576, %v901
        %v903 = vpop.f32.mrf.mxu0
        %904 = vmatprep.mubr.f32.mxu0 0.0
        %905 = vmatmul.mubr.f32.gmra.mxu0 %v739
        %v906 = vpop.f32.mrf.mxu0
        %v907 = vadd.f32 %v581, %v906
        %v908 = vpop.f32.mrf.mxu0
        %909 = vmatprep.mubr.f32.mxu0 0.0
        %910 = vmatmul.mubr.f32.gmra.mxu0 %v742
        %v911 = vpop.f32.mrf.mxu0
        %v912 = vadd.f32 %v586, %v911
        %v913 = vpop.f32.mrf.mxu0
        %914 = vmatprep.mubr.f32.mxu0 0.0
        %915 = vmatmul.mubr.f32.gmra.mxu0 %v745
        %v916 = vpop.f32.mrf.mxu0
        %v917 = vadd.f32 %v591, %v916
        %v918 = vpop.f32.mrf.mxu0
        %919 = vmatprep.mubr.f32.mxu0 0.0
        %920 = vmatmul.mubr.f32.gmra.mxu0 %v748
        %v921 = vpop.f32.mrf.mxu0
        %v922 = vadd.f32 %v596, %v921
        %v923 = vpop.f32.mrf.mxu0
        %924 = vmatprep.mubr.f32.mxu0 0.0
        %925 = vmatmul.mubr.f32.gmra.mxu0 %v751
        %v926 = vpop.f32.mrf.mxu0
        %v927 = vadd.f32 %v601, %v926
        %v928 = vpop.f32.mrf.mxu0
        %929 = vmatprep.mubr.f32.mxu0 0.0
        %930 = vmatmul.mubr.f32.gmra.mxu0 %v754
        %v931 = vpop.f32.mrf.mxu0
        %v932 = vadd.f32 %v606, %v931
        %v933 = vpop.f32.mrf.mxu0
        %934 = vmatprep.mubr.f32.mxu0 0.0
        %935 = vmatmul.mubr.f32.gmra.mxu0 %v757
        %v936 = vpop.f32.mrf.mxu0
        %v937 = vadd.f32 %v611, %v936
        %v938 = vpop.f32.mrf.mxu0
        %939 = vmatprep.mubr.f32.mxu0 0.0
        %940 = vmatmul.mubr.f32.gmra.mxu0 %v760
        %v941 = vpop.f32.mrf.mxu0
        %v942 = vadd.f32 %v616, %v941
        %v943 = vpop.f32.mrf.mxu0
        %944 = vmatprep.mubr.f32.mxu0 0.0
        %945 = vmatmul.mubr.f32.gmra.mxu0 %v763
        %v946 = vpop.f32.mrf.mxu0
        %v947 = vadd.f32 %v621, %v946
        %v948 = vpop.f32.mrf.mxu0
        %949 = vmatprep.mubr.f32.mxu0 0.0
        %950 = vmatmul.mubr.f32.gmra.mxu0 %v766
        %v951 = vpop.f32.mrf.mxu0
        %v952 = vadd.f32 %v626, %v951
        %v953 = vpop.f32.mrf.mxu0
        %954 = vmatprep.mubr.f32.mxu0 0.0
        %955 = vmatmul.mubr.f32.gmra.mxu0 %v769
        %v956 = vpop.f32.mrf.mxu0
        %v957 = vadd.f32 %v631, %v956
        %v958 = vpop.f32.mrf.mxu0
        %959 = vmatprep.mubr.f32.mxu0 0.0
        %960 = vmatmul.mubr.f32.gmra.mxu0 %v772
        %v961 = vpop.f32.mrf.mxu0
        %v962 = vadd.f32 %v636, %v961
        %v963 = vpop.f32.mrf.mxu0
        %964 = vmatprep.mubr.f32.mxu0 0.0
        %965 = vmatmul.mubr.f32.gmra.mxu0 %v775
        %v966 = vpop.f32.mrf.mxu0
        %v967 = vadd.f32 %v641, %v966
        %v968 = vpop.f32.mrf.mxu0
        %969 = vmatprep.mubr.f32.mxu0 0.0
        %970 = vmatmul.mubr.f32.gmra.mxu0 %v778
        %v971 = vpop.f32.mrf.mxu0
        %v972 = vadd.f32 %v646, %v971
        %v973 = vpop.f32.mrf.mxu0
        %974 = vmatprep.mubr.f32.mxu0 0.0
        %975 = vmatmul.mubr.f32.gmra.mxu0 %v781
        %v976 = vpop.f32.mrf.mxu0
        %v977 = vadd.f32 %v651, %v976
        %v978 = vpop.f32.mrf.mxu0
        %979 = vmatprep.mubr.f32.mxu0 0.0
        %980 = vmatmul.mubr.f32.gmra.mxu0 %v784
        %v981 = vpop.f32.mrf.mxu0
        %v982 = vadd.f32 %v656, %v981
        %v983 = vpop.f32.mrf.mxu0
        %984 = vmatprep.mubr.f32.mxu0 0.0
        %985 = vmatmul.mubr.f32.gmra.mxu0 %v787
        %v986 = vpop.f32.mrf.mxu0
        %v987 = vadd.f32 %v661, %v986
        %v988 = vpop.f32.mrf.mxu0
        %989 = vmatprep.mubr.f32.mxu0 0.0
        %990 = vmatmul.mubr.f32.gmra.mxu0 %v790
        %v991 = vpop.f32.mrf.mxu0
        %v992 = vadd.f32 %v666, %v991
        %v993 = vpop.f32.mrf.mxu0
        %994 = vmatprep.mubr.f32.mxu0 0.0
        %995 = vmatmul.mubr.f32.gmra.mxu0 %v793
        %v996 = vpop.f32.mrf.mxu0
        %v997 = vadd.f32 %v671, %v996
        %v998 = vpop.f32.mrf.mxu0
        %999 = vmatprep.mubr.f32.mxu0 0.0
        %1000 = vmatmul.mubr.f32.gmra.mxu0 %v796
        %v1001 = vpop.f32.mrf.mxu0
        %v1002 = vadd.f32 %v676, %v1001
        %v1003 = vpop.f32.mrf.mxu0
        %1004 = vmatprep.mubr.f32.mxu0 0.0
        %1005 = vmatmul.mubr.f32.gmra.mxu0 %v799
        %v1006 = vpop.f32.mrf.mxu0
        %v1007 = vadd.f32 %v681, %v1006
        %v1008 = vpop.f32.mrf.mxu0
        %1009 = vmatprep.mubr.f32.mxu0 0.0
        %1010 = vmatmul.mubr.f32.gmra.mxu0 %v802
        %v1011 = vpop.f32.mrf.mxu0
        %v1012 = vadd.f32 %v686, %v1011
        %v1013 = vpop.f32.mrf.mxu0
        %1014 = vmatprep.mubr.f32.mxu0 0.0
        %1015 = vmatmul.mubr.f32.gmra.mxu0 %v805
        %v1016 = vpop.f32.mrf.mxu0
        %v1017 = vadd.f32 %v691, %v1016
        %v1018 = vpop.f32.mrf.mxu0
        %1019 = vmatprep.mubr.f32.mxu0 0.0
        %1020 = vmatmul.mubr.f32.gmra.mxu0 %v808
        %v1021 = vpop.f32.mrf.mxu0
        %v1022 = vadd.f32 %v696, %v1021
        %v1023 = vpop.f32.mrf.mxu0
        %1024 = vmatprep.mubr.f32.mxu0 0.0
        %1025 = vmatmul.mubr.f32.gmra.mxu0 %v811
        %v1026 = vpop.f32.mrf.mxu0
        %v1027 = vadd.f32 %v701, %v1026
        %v1028 = vpop.f32.mrf.mxu0
        %1029 = vmatprep.mubr.f32.mxu0 0.0
        %1030 = vmatmul.mubr.f32.gmra.mxu0 %v814
        %v1031 = vpop.f32.mrf.mxu0
        %v1032 = vadd.f32 %v706, %v1031
        %v1033 = vpop.f32.mrf.mxu0
        %1034 = vmatprep.mubr.f32.mxu0 0.0
        %1035 = vmatmul.mubr.f32.gmra.mxu0 %v817
        %v1036 = vpop.f32.mrf.mxu0
        %v1037 = vadd.f32 %v711, %v1036
        %v1038 = vpop.f32.mrf.mxu0
        %1039 = vmatprep.mubr.f32.mxu0 0.0
        %1040 = vmatmul.mubr.f32.gmra.mxu0 %v820
        %v1041 = vpop.f32.mrf.mxu0
        %v1042 = vadd.f32 %v716, %v1041
        %v1043 = vpop.f32.mrf.mxu0
        %1044 = vmatprep.mubr.f32.mxu0 0.0
        %1045 = vmatmul.mubr.f32.gmra.mxu0 %v823
        %v1046 = vpop.f32.mrf.mxu0
        %v1047 = vadd.f32 %v721, %v1046
        %v1048 = vpop.f32.mrf.mxu0
        %1049 = vmatprep.mubr.f32.mxu0 0.0
        %1050 = vmatmul.mubr.f32.gmra.mxu0 %v826
        %v1051 = vpop.f32.mrf.mxu0
        %v1052 = vadd.f32 %v726, %v1051
        %v1053 = vpop.f32.mrf.mxu0
        %1054 = vmatprep.mubr.f32.mxu0 0.0
        %1055 = vmatmul.mubr.f32.gmra.mxu0 %v829
        %v1056 = vpop.f32.mrf.mxu0
        %v1057 = vadd.f32 %v731, %v1056
        %v1058 = vpop.f32.mrf.mxu0
        %1059 = vdwg.mxu0
        %v1060 = vld [vmem:[%s4] sm:$0xff]
        %v1061 = vld [vmem:[%s4 + $0x8] sm:$0xff]
        %v1062 = vld [vmem:[%s4 + $0x10] sm:$0xff]
        %v1063 = vld [vmem:[%s4 + $0x18] sm:$0xff]
        %v1064 = vld [vmem:[%s4 + $0x20] sm:$0xff]
        %v1065 = vld [vmem:[%s4 + $0x28] sm:$0xff]
        %v1066 = vld [vmem:[%s4 + $0x30] sm:$0xff]
        %v1067 = vld [vmem:[%s4 + $0x38] sm:$0xff]
        %v1068 = vld [vmem:[%s4 + $0x40] sm:$0xff]
        %v1069 = vld [vmem:[%s4 + $0x48] sm:$0xff]
        %v1070 = vld [vmem:[%s4 + $0x50] sm:$0xff]
        %v1071 = vld [vmem:[%s4 + $0x58] sm:$0xff]
        %v1072 = vld [vmem:[%s4 + $0x60] sm:$0xff]
        %v1073 = vld [vmem:[%s4 + $0x68] sm:$0xff]
        %v1074 = vld [vmem:[%s4 + $0x70] sm:$0xff]
        %v1075 = vld [vmem:[%s4 + $0x78] sm:$0xff]
        %v1076 = vld [vmem:[%s4 + $0x80] sm:$0xff]
        %v1077 = vld [vmem:[%s4 + $0x88] sm:$0xff]
        %v1078 = vld [vmem:[%s4 + $0x90] sm:$0xff]
        %v1079 = vld [vmem:[%s4 + $0x98] sm:$0xff]
        %v1080 = vld [vmem:[%s4 + $0xa0] sm:$0xff]
        %v1081 = vld [vmem:[%s4 + $0xa8] sm:$0xff]
        %v1082 = vld [vmem:[%s4 + $0xb0] sm:$0xff]
        %v1083 = vld [vmem:[%s4 + $0xb8] sm:$0xff]
        %v1084 = vld [vmem:[%s4 + $0xc0] sm:$0xff]
        %v1085 = vld [vmem:[%s4 + $0xc8] sm:$0xff]
        %v1086 = vld [vmem:[%s4 + $0xd0] sm:$0xff]
        %v1087 = vld [vmem:[%s4 + $0xd8] sm:$0xff]
        %v1088 = vld [vmem:[%s4 + $0xe0] sm:$0xff]
        %v1089 = vld [vmem:[%s4 + $0xe8] sm:$0xff]
        %v1090 = vld [vmem:[%s4 + $0xf0] sm:$0xff]
        %v1091 = vld [vmem:[%s4 + $0xf8] sm:$0xff]
        %1093 = vset.pattern.permute.xlu0 0
        %1094 = vperm.xlu0 %1093, %v1060
        %v1095 = vpop.permute.xlu0 %1094
        %1098 = vset.pattern.permute.xlu0 0
        %1099 = vperm.xlu0 %1098, %v1061
        %v1100 = vpop.permute.xlu0 %1099
        %1103 = vset.pattern.permute.xlu0 0
        %1104 = vperm.xlu0 %1103, %v1062
        %v1105 = vpop.permute.xlu0 %1104
        %1108 = vset.pattern.permute.xlu0 0
        %1109 = vperm.xlu0 %1108, %v1063
        %v1110 = vpop.permute.xlu0 %1109
        %1113 = vset.pattern.permute.xlu0 0
        %1114 = vperm.xlu0 %1113, %v1064
        %v1115 = vpop.permute.xlu0 %1114
        %1118 = vset.pattern.permute.xlu0 0
        %1119 = vperm.xlu0 %1118, %v1065
        %v1120 = vpop.permute.xlu0 %1119
        %1123 = vset.pattern.permute.xlu0 0
        %1124 = vperm.xlu0 %1123, %v1066
        %v1125 = vpop.permute.xlu0 %1124
        %1128 = vset.pattern.permute.xlu0 0
        %1129 = vperm.xlu0 %1128, %v1067
        %v1130 = vpop.permute.xlu0 %1129
        %1133 = vset.pattern.permute.xlu0 0
        %1134 = vperm.xlu0 %1133, %v1068
        %v1135 = vpop.permute.xlu0 %1134
        %1138 = vset.pattern.permute.xlu0 0
        %1139 = vperm.xlu0 %1138, %v1069
        %v1140 = vpop.permute.xlu0 %1139
        %1143 = vset.pattern.permute.xlu0 0
        %1144 = vperm.xlu0 %1143, %v1070
        %v1145 = vpop.permute.xlu0 %1144
        %1148 = vset.pattern.permute.xlu0 0
        %1149 = vperm.xlu0 %1148, %v1071
        %v1150 = vpop.permute.xlu0 %1149
        %1153 = vset.pattern.permute.xlu0 0
        %1154 = vperm.xlu0 %1153, %v1072
        %v1155 = vpop.permute.xlu0 %1154
        %1158 = vset.pattern.permute.xlu0 0
        %1159 = vperm.xlu0 %1158, %v1073
        %v1160 = vpop.permute.xlu0 %1159
        %1163 = vset.pattern.permute.xlu0 0
        %1164 = vperm.xlu0 %1163, %v1074
        %v1165 = vpop.permute.xlu0 %1164
        %1168 = vset.pattern.permute.xlu0 0
        %1169 = vperm.xlu0 %1168, %v1075
        %v1170 = vpop.permute.xlu0 %1169
        %1173 = vset.pattern.permute.xlu0 0
        %1174 = vperm.xlu0 %1173, %v1076
        %v1175 = vpop.permute.xlu0 %1174
        %1178 = vset.pattern.permute.xlu0 0
        %1179 = vperm.xlu0 %1178, %v1077
        %v1180 = vpop.permute.xlu0 %1179
        %1183 = vset.pattern.permute.xlu0 0
        %1184 = vperm.xlu0 %1183, %v1078
        %v1185 = vpop.permute.xlu0 %1184
        %1188 = vset.pattern.permute.xlu0 0
        %1189 = vperm.xlu0 %1188, %v1079
        %v1190 = vpop.permute.xlu0 %1189
        %1193 = vset.pattern.permute.xlu0 0
        %1194 = vperm.xlu0 %1193, %v1080
        %v1195 = vpop.permute.xlu0 %1194
        %1198 = vset.pattern.permute.xlu0 0
        %1199 = vperm.xlu0 %1198, %v1081
        %v1200 = vpop.permute.xlu0 %1199
        %1203 = vset.pattern.permute.xlu0 0
        %1204 = vperm.xlu0 %1203, %v1082
        %v1205 = vpop.permute.xlu0 %1204
        %1208 = vset.pattern.permute.xlu0 0
        %1209 = vperm.xlu0 %1208, %v1083
        %v1210 = vpop.permute.xlu0 %1209
        %1213 = vset.pattern.permute.xlu0 0
        %1214 = vperm.xlu0 %1213, %v1084
        %v1215 = vpop.permute.xlu0 %1214
        %1218 = vset.pattern.permute.xlu0 0
        %1219 = vperm.xlu0 %1218, %v1085
        %v1220 = vpop.permute.xlu0 %1219
        %1223 = vset.pattern.permute.xlu0 0
        %1224 = vperm.xlu0 %1223, %v1086
        %v1225 = vpop.permute.xlu0 %1224
        %1228 = vset.pattern.permute.xlu0 0
        %1229 = vperm.xlu0 %1228, %v1087
        %v1230 = vpop.permute.xlu0 %1229
        %1233 = vset.pattern.permute.xlu0 0
        %1234 = vperm.xlu0 %1233, %v1088
        %v1235 = vpop.permute.xlu0 %1234
        %1238 = vset.pattern.permute.xlu0 0
        %1239 = vperm.xlu0 %1238, %v1089
        %v1240 = vpop.permute.xlu0 %1239
        %1243 = vset.pattern.permute.xlu0 0
        %1244 = vperm.xlu0 %1243, %v1090
        %v1245 = vpop.permute.xlu0 %1244
        %1248 = vset.pattern.permute.xlu0 0
        %1249 = vperm.xlu0 %1248, %v1091
        %v1250 = vpop.permute.xlu0 %1249
        %v1252 = vadd.f32 %v902, %v1095
        %v1253 = vadd.f32 %v907, %v1100
        %v1254 = vadd.f32 %v912, %v1105
        %v1255 = vadd.f32 %v917, %v1110
        %v1256 = vadd.f32 %v922, %v1115
        %v1257 = vadd.f32 %v927, %v1120
        %v1258 = vadd.f32 %v932, %v1125
        %v1259 = vadd.f32 %v937, %v1130
        %v1260 = vadd.f32 %v942, %v1135
        %v1261 = vadd.f32 %v947, %v1140
        %v1262 = vadd.f32 %v952, %v1145
        %v1263 = vadd.f32 %v957, %v1150
        %v1264 = vadd.f32 %v962, %v1155
        %v1265 = vadd.f32 %v967, %v1160
        %v1266 = vadd.f32 %v972, %v1165
        %v1267 = vadd.f32 %v977, %v1170
        %v1268 = vadd.f32 %v982, %v1175
        %v1269 = vadd.f32 %v987, %v1180
        %v1270 = vadd.f32 %v992, %v1185
        %v1271 = vadd.f32 %v997, %v1190
        %v1272 = vadd.f32 %v1002, %v1195
        %v1273 = vadd.f32 %v1007, %v1200
        %v1274 = vadd.f32 %v1012, %v1205
        %v1275 = vadd.f32 %v1017, %v1210
        %v1276 = vadd.f32 %v1022, %v1215
        %v1277 = vadd.f32 %v1027, %v1220
        %v1278 = vadd.f32 %v1032, %v1225
        %v1279 = vadd.f32 %v1037, %v1230
        %v1280 = vadd.f32 %v1042, %v1235
        %v1281 = vadd.f32 %v1047, %v1240
        %v1282 = vadd.f32 %v1052, %v1245
        %v1283 = vadd.f32 %v1057, %v1250
        %v1284 = vmax.f32 %v1252, 0.0
        %v1285 = vmax.f32 %v1253, 0.0
        %v1286 = vmax.f32 %v1254, 0.0
        %v1287 = vmax.f32 %v1255, 0.0
        %v1288 = vmax.f32 %v1256, 0.0
        %v1289 = vmax.f32 %v1257, 0.0
        %v1290 = vmax.f32 %v1258, 0.0
        %v1291 = vmax.f32 %v1259, 0.0
        %v1292 = vmax.f32 %v1260, 0.0
        %v1293 = vmax.f32 %v1261, 0.0
        %v1294 = vmax.f32 %v1262, 0.0
        %v1295 = vmax.f32 %v1263, 0.0
        %v1296 = vmax.f32 %v1264, 0.0
        %v1297 = vmax.f32 %v1265, 0.0
        %v1298 = vmax.f32 %v1266, 0.0
        %v1299 = vmax.f32 %v1267, 0.0
        %v1300 = vmax.f32 %v1268, 0.0
        %v1301 = vmax.f32 %v1269, 0.0
        %v1302 = vmax.f32 %v1270, 0.0
        %v1303 = vmax.f32 %v1271, 0.0
        %v1304 = vmax.f32 %v1272, 0.0
        %v1305 = vmax.f32 %v1273, 0.0
        %v1306 = vmax.f32 %v1274, 0.0
        %v1307 = vmax.f32 %v1275, 0.0
        %v1308 = vmax.f32 %v1276, 0.0
        %v1309 = vmax.f32 %v1277, 0.0
        %v1310 = vmax.f32 %v1278, 0.0
        %v1311 = vmax.f32 %v1279, 0.0
        %v1312 = vmax.f32 %v1280, 0.0
        %v1313 = vmax.f32 %v1281, 0.0
        %v1314 = vmax.f32 %v1282, 0.0
        %v1315 = vmax.f32 %v1283, 0.0
        %v1316 = vld [vmem:[%s5] sm:$0xff]
        %v1317 = vld [vmem:[%s5 + $0x8] sm:$0xff]
        %v1318 = vld [vmem:[%s5 + $0x10] sm:$0xff]
        %v1319 = vld [vmem:[%s5 + $0x18] sm:$0xff]
        %v1320 = vld [vmem:[%s5 + $0x20] sm:$0xff]
        %v1321 = vld [vmem:[%s5 + $0x28] sm:$0xff]
        %v1322 = vld [vmem:[%s5 + $0x30] sm:$0xff]
        %v1323 = vld [vmem:[%s5 + $0x38] sm:$0xff]
        %v1324 = vld [vmem:[%s5 + $0x40] sm:$0xff]
        %v1325 = vld [vmem:[%s5 + $0x48] sm:$0xff]
        %v1326 = vld [vmem:[%s5 + $0x50] sm:$0xff]
        %v1327 = vld [vmem:[%s5 + $0x58] sm:$0xff]
        %v1328 = vld [vmem:[%s5 + $0x60] sm:$0xff]
        %v1329 = vld [vmem:[%s5 + $0x68] sm:$0xff]
        %v1330 = vld [vmem:[%s5 + $0x70] sm:$0xff]
        %v1331 = vld [vmem:[%s5 + $0x78] sm:$0xff]
        %v1332 = vld [vmem:[%s5 + $0x80] sm:$0xff]
        %v1333 = vld [vmem:[%s5 + $0x88] sm:$0xff]
        %v1334 = vld [vmem:[%s5 + $0x90] sm:$0xff]
        %v1335 = vld [vmem:[%s5 + $0x98] sm:$0xff]
        %v1336 = vld [vmem:[%s5 + $0xa0] sm:$0xff]
        %v1337 = vld [vmem:[%s5 + $0xa8] sm:$0xff]
        %v1338 = vld [vmem:[%s5 + $0xb0] sm:$0xff]
        %v1339 = vld [vmem:[%s5 + $0xb8] sm:$0xff]
        %v1340 = vld [vmem:[%s5 + $0xc0] sm:$0xff]
        %v1341 = vld [vmem:[%s5 + $0xc8] sm:$0xff]
        %v1342 = vld [vmem:[%s5 + $0xd0] sm:$0xff]
        %v1343 = vld [vmem:[%s5 + $0xd8] sm:$0xff]
        %v1344 = vld [vmem:[%s5 + $0xe0] sm:$0xff]
        %v1345 = vld [vmem:[%s5 + $0xe8] sm:$0xff]
        %v1346 = vld [vmem:[%s5 + $0xf0] sm:$0xff]
        %v1347 = vld [vmem:[%s5 + $0xf8] sm:$0xff]
        %v1348 = vld [vmem:[%s5 + $0x100] sm:$0xff]
        %v1349 = vld [vmem:[%s5 + $0x108] sm:$0xff]
        %v1350 = vld [vmem:[%s5 + $0x110] sm:$0xff]
        %v1351 = vld [vmem:[%s5 + $0x118] sm:$0xff]
        %v1352 = vld [vmem:[%s5 + $0x120] sm:$0xff]
        %v1353 = vld [vmem:[%s5 + $0x128] sm:$0xff]
        %v1354 = vld [vmem:[%s5 + $0x130] sm:$0xff]
        %v1355 = vld [vmem:[%s5 + $0x138] sm:$0xff]
        %v1356 = vld [vmem:[%s5 + $0x140] sm:$0xff]
        %v1357 = vld [vmem:[%s5 + $0x148] sm:$0xff]
        %v1358 = vld [vmem:[%s5 + $0x150] sm:$0xff]
        %v1359 = vld [vmem:[%s5 + $0x158] sm:$0xff]
        %v1360 = vld [vmem:[%s5 + $0x160] sm:$0xff]
        %v1361 = vld [vmem:[%s5 + $0x168] sm:$0xff]
        %v1362 = vld [vmem:[%s5 + $0x170] sm:$0xff]
        %v1363 = vld [vmem:[%s5 + $0x178] sm:$0xff]
        %v1364 = vld [vmem:[%s5 + $0x180] sm:$0xff]
        %v1365 = vld [vmem:[%s5 + $0x188] sm:$0xff]
        %v1366 = vld [vmem:[%s5 + $0x190] sm:$0xff]
        %v1367 = vld [vmem:[%s5 + $0x198] sm:$0xff]
        %v1368 = vld [vmem:[%s5 + $0x1a0] sm:$0xff]
        %v1369 = vld [vmem:[%s5 + $0x1a8] sm:$0xff]
        %v1370 = vld [vmem:[%s5 + $0x1b0] sm:$0xff]
        %v1371 = vld [vmem:[%s5 + $0x1b8] sm:$0xff]
        %v1372 = vld [vmem:[%s5 + $0x1c0] sm:$0xff]
        %v1373 = vld [vmem:[%s5 + $0x1c8] sm:$0xff]
        %v1374 = vld [vmem:[%s5 + $0x1d0] sm:$0xff]
        %v1375 = vld [vmem:[%s5 + $0x1d8] sm:$0xff]
        %v1376 = vld [vmem:[%s5 + $0x1e0] sm:$0xff]
        %v1377 = vld [vmem:[%s5 + $0x1e8] sm:$0xff]
        %v1378 = vld [vmem:[%s5 + $0x1f0] sm:$0xff]
        %v1379 = vld [vmem:[%s5 + $0x1f8] sm:$0xff]
        %v1380 = vld [vmem:[%s6] sm:$0xff]
        %v1381 = vld [vmem:[%s6 + $0x8] sm:$0xff]
        %v1382 = vld [vmem:[%s6 + $0x10] sm:$0xff]
        %v1383 = vld [vmem:[%s6 + $0x18] sm:$0xff]
        %v1384 = vld [vmem:[%s6 + $0x20] sm:$0xff]
        %v1385 = vld [vmem:[%s6 + $0x28] sm:$0xff]
        %v1386 = vld [vmem:[%s6 + $0x30] sm:$0xff]
        %v1387 = vld [vmem:[%s6 + $0x38] sm:$0xff]
        %v1388 = vld [vmem:[%s6 + $0x40] sm:$0xff]
        %v1389 = vld [vmem:[%s6 + $0x48] sm:$0xff]
        %v1390 = vld [vmem:[%s6 + $0x50] sm:$0xff]
        %v1391 = vld [vmem:[%s6 + $0x58] sm:$0xff]
        %v1392 = vld [vmem:[%s6 + $0x60] sm:$0xff]
        %v1393 = vld [vmem:[%s6 + $0x68] sm:$0xff]
        %v1394 = vld [vmem:[%s6 + $0x70] sm:$0xff]
        %v1395 = vld [vmem:[%s6 + $0x78] sm:$0xff]
        %v1396 = vld [vmem:[%s6 + $0x80] sm:$0xff]
        %v1397 = vld [vmem:[%s6 + $0x88] sm:$0xff]
        %v1398 = vld [vmem:[%s6 + $0x90] sm:$0xff]
        %v1399 = vld [vmem:[%s6 + $0x98] sm:$0xff]
        %v1400 = vld [vmem:[%s6 + $0xa0] sm:$0xff]
        %v1401 = vld [vmem:[%s6 + $0xa8] sm:$0xff]
        %v1402 = vld [vmem:[%s6 + $0xb0] sm:$0xff]
        %v1403 = vld [vmem:[%s6 + $0xb8] sm:$0xff]
        %v1404 = vld [vmem:[%s6 + $0xc0] sm:$0xff]
        %v1405 = vld [vmem:[%s6 + $0xc8] sm:$0xff]
        %v1406 = vld [vmem:[%s6 + $0xd0] sm:$0xff]
        %v1407 = vld [vmem:[%s6 + $0xd8] sm:$0xff]
        %v1408 = vld [vmem:[%s6 + $0xe0] sm:$0xff]
        %v1409 = vld [vmem:[%s6 + $0xe8] sm:$0xff]
        %v1410 = vld [vmem:[%s6 + $0xf0] sm:$0xff]
        %v1411 = vld [vmem:[%s6 + $0xf8] sm:$0xff]
        %1413 = vset.pattern.permute.xlu0 0
        %1414 = vperm.xlu0 %1413, %v1380
        %v1415 = vpop.permute.xlu0 %1414
        %1418 = vset.pattern.permute.xlu0 0
        %1419 = vperm.xlu0 %1418, %v1381
        %v1420 = vpop.permute.xlu0 %1419
        %1423 = vset.pattern.permute.xlu0 0
        %1424 = vperm.xlu0 %1423, %v1382
        %v1425 = vpop.permute.xlu0 %1424
        %1428 = vset.pattern.permute.xlu0 0
        %1429 = vperm.xlu0 %1428, %v1383
        %v1430 = vpop.permute.xlu0 %1429
        %1433 = vset.pattern.permute.xlu0 0
        %1434 = vperm.xlu0 %1433, %v1384
        %v1435 = vpop.permute.xlu0 %1434
        %1438 = vset.pattern.permute.xlu0 0
        %1439 = vperm.xlu0 %1438, %v1385
        %v1440 = vpop.permute.xlu0 %1439
        %1443 = vset.pattern.permute.xlu0 0
        %1444 = vperm.xlu0 %1443, %v1386
        %v1445 = vpop.permute.xlu0 %1444
        %1448 = vset.pattern.permute.xlu0 0
        %1449 = vperm.xlu0 %1448, %v1387
        %v1450 = vpop.permute.xlu0 %1449
        %1453 = vset.pattern.permute.xlu0 0
        %1454 = vperm.xlu0 %1453, %v1388
        %v1455 = vpop.permute.xlu0 %1454
        %1458 = vset.pattern.permute.xlu0 0
        %1459 = vperm.xlu0 %1458, %v1389
        %v1460 = vpop.permute.xlu0 %1459
        %1463 = vset.pattern.permute.xlu0 0
        %1464 = vperm.xlu0 %1463, %v1390
        %v1465 = vpop.permute.xlu0 %1464
        %1468 = vset.pattern.permute.xlu0 0
        %1469 = vperm.xlu0 %1468, %v1391
        %v1470 = vpop.permute.xlu0 %1469
        %1473 = vset.pattern.permute.xlu0 0
        %1474 = vperm.xlu0 %1473, %v1392
        %v1475 = vpop.permute.xlu0 %1474
        %1478 = vset.pattern.permute.xlu0 0
        %1479 = vperm.xlu0 %1478, %v1393
        %v1480 = vpop.permute.xlu0 %1479
        %1483 = vset.pattern.permute.xlu0 0
        %1484 = vperm.xlu0 %1483, %v1394
        %v1485 = vpop.permute.xlu0 %1484
        %1488 = vset.pattern.permute.xlu0 0
        %1489 = vperm.xlu0 %1488, %v1395
        %v1490 = vpop.permute.xlu0 %1489
        %1493 = vset.pattern.permute.xlu0 0
        %1494 = vperm.xlu0 %1493, %v1396
        %v1495 = vpop.permute.xlu0 %1494
        %1498 = vset.pattern.permute.xlu0 0
        %1499 = vperm.xlu0 %1498, %v1397
        %v1500 = vpop.permute.xlu0 %1499
        %1503 = vset.pattern.permute.xlu0 0
        %1504 = vperm.xlu0 %1503, %v1398
        %v1505 = vpop.permute.xlu0 %1504
        %1508 = vset.pattern.permute.xlu0 0
        %1509 = vperm.xlu0 %1508, %v1399
        %v1510 = vpop.permute.xlu0 %1509
        %1513 = vset.pattern.permute.xlu0 0
        %1514 = vperm.xlu0 %1513, %v1400
        %v1515 = vpop.permute.xlu0 %1514
        %1518 = vset.pattern.permute.xlu0 0
        %1519 = vperm.xlu0 %1518, %v1401
        %v1520 = vpop.permute.xlu0 %1519
        %1523 = vset.pattern.permute.xlu0 0
        %1524 = vperm.xlu0 %1523, %v1402
        %v1525 = vpop.permute.xlu0 %1524
        %1528 = vset.pattern.permute.xlu0 0
        %1529 = vperm.xlu0 %1528, %v1403
        %v1530 = vpop.permute.xlu0 %1529
        %1533 = vset.pattern.permute.xlu0 0
        %1534 = vperm.xlu0 %1533, %v1404
        %v1535 = vpop.permute.xlu0 %1534
        %1538 = vset.pattern.permute.xlu0 0
        %1539 = vperm.xlu0 %1538, %v1405
        %v1540 = vpop.permute.xlu0 %1539
        %1543 = vset.pattern.permute.xlu0 0
        %1544 = vperm.xlu0 %1543, %v1406
        %v1545 = vpop.permute.xlu0 %1544
        %1548 = vset.pattern.permute.xlu0 0
        %1549 = vperm.xlu0 %1548, %v1407
        %v1550 = vpop.permute.xlu0 %1549
        %1553 = vset.pattern.permute.xlu0 0
        %1554 = vperm.xlu0 %1553, %v1408
        %v1555 = vpop.permute.xlu0 %1554
        %1558 = vset.pattern.permute.xlu0 0
        %1559 = vperm.xlu0 %1558, %v1409
        %v1560 = vpop.permute.xlu0 %1559
        %1563 = vset.pattern.permute.xlu0 0
        %1564 = vperm.xlu0 %1563, %v1410
        %v1565 = vpop.permute.xlu0 %1564
        %1568 = vset.pattern.permute.xlu0 0
        %1569 = vperm.xlu0 %1568, %v1411
        %v1570 = vpop.permute.xlu0 %1569
        %1572 = vmatprep.subr.mxu0 0.0
        %1573 = vmatpush1.msra.mxu0 %v1299
        %1574 = vmatprep.subr.mxu0 0.0
        %1575 = vmatpush1.msra.mxu0 %v1298
        %1576 = vmatprep.subr.mxu0 0.0
        %1577 = vmatpush1.msra.mxu0 %v1297
        %1578 = vmatprep.subr.mxu0 0.0
        %1579 = vmatpush1.msra.mxu0 %v1296
        %1580 = vmatprep.subr.mxu0 0.0
        %1581 = vmatpush1.msra.mxu0 %v1295
        %1582 = vmatprep.subr.mxu0 0.0
        %1583 = vmatpush1.msra.mxu0 %v1294
        %1584 = vmatprep.subr.mxu0 0.0
        %1585 = vmatpush1.msra.mxu0 %v1293
        %1586 = vmatprep.subr.mxu0 0.0
        %1587 = vmatpush1.msra.mxu0 %v1292
        %1588 = vmatprep.subr.mxu0 0.0
        %1589 = vmatpush1.msra.mxu0 %v1291
        %1590 = vmatprep.subr.mxu0 0.0
        %1591 = vmatpush1.msra.mxu0 %v1290
        %1592 = vmatprep.subr.mxu0 0.0
        %1593 = vmatpush1.msra.mxu0 %v1289
        %1594 = vmatprep.subr.mxu0 0.0
        %1595 = vmatpush1.msra.mxu0 %v1288
        %1596 = vmatprep.subr.mxu0 0.0
        %1597 = vmatpush1.msra.mxu0 %v1287
        %1598 = vmatprep.subr.mxu0 0.0
        %1599 = vmatpush1.msra.mxu0 %v1286
        %1600 = vmatprep.subr.mxu0 0.0
        %1601 = vmatpush1.msra.mxu0 %v1285
        %1602 = vmatprep.subr.mxu0 0.0
        %1603 = vmatpush1.msra.mxu0 %v1284
        %1604 = vmatprep.subr.mxu0 0.0
        %1605 = vmatpush2.msra.mxu0 %v1315
        %1606 = vmatprep.subr.mxu0 0.0
        %1607 = vmatpush2.msra.mxu0 %v1314
        %1608 = vmatprep.subr.mxu0 0.0
        %1609 = vmatpush2.msra.mxu0 %v1313
        %1610 = vmatprep.subr.mxu0 0.0
        %1611 = vmatpush2.msra.mxu0 %v1312
        %1612 = vmatprep.subr.mxu0 0.0
        %1613 = vmatpush2.msra.mxu0 %v1311
        %1614 = vmatprep.subr.mxu0 0.0
        %1615 = vmatpush2.msra.mxu0 %v1310
        %1616 = vmatprep.subr.mxu0 0.0
        %1617 = vmatpush2.msra.mxu0 %v1309
        %1618 = vmatprep.subr.mxu0 0.0
        %1619 = vmatpush2.msra.mxu0 %v1308
        %1620 = vmatprep.subr.mxu0 0.0
        %1621 = vmatpush2.msra.mxu0 %v1307
        %1622 = vmatprep.subr.mxu0 0.0
        %1623 = vmatpush2.msra.mxu0 %v1306
        %1624 = vmatprep.subr.mxu0 0.0
        %1625 = vmatpush2.msra.mxu0 %v1305
        %1626 = vmatprep.subr.mxu0 0.0
        %1627 = vmatpush2.msra.mxu0 %v1304
        %1628 = vmatprep.subr.mxu0 0.0
        %1629 = vmatpush2.msra.mxu0 %v1303
        %1630 = vmatprep.subr.mxu0 0.0
        %1631 = vmatpush2.msra.mxu0 %v1302
        %1632 = vmatprep.subr.mxu0 0.0
        %1633 = vmatpush2.msra.mxu0 %v1301
        %1634 = vmatprep.subr.mxu0 0.0
        %1635 = vmatpush2.msra.mxu0 %v1300
        %1636 = vmatprep.mubr.f32.mxu0 %v1317
        %1637 = vmatmul.mubr.f32.gmra.mxu0 %v1316
        %v1638 = vpop.f32.mrf.mxu0
        %v1639 = vadd.f32 %v1415, %v1638
        %v1640 = vpop.f32.mrf.mxu0
        %1641 = vmatprep.mubr.f32.mxu0 %v1319
        %1642 = vmatmul.mubr.f32.gmra.mxu0 %v1318
        %v1643 = vpop.f32.mrf.mxu0
        %v1644 = vadd.f32 %v1420, %v1643
        %v1645 = vpop.f32.mrf.mxu0
        %1646 = vmatprep.mubr.f32.mxu0 %v1321
        %1647 = vmatmul.mubr.f32.gmra.mxu0 %v1320
        %v1648 = vpop.f32.mrf.mxu0
        %v1649 = vadd.f32 %v1425, %v1648
        %v1650 = vpop.f32.mrf.mxu0
        %1651 = vmatprep.mubr.f32.mxu0 %v1323
        %1652 = vmatmul.mubr.f32.gmra.mxu0 %v1322
        %v1653 = vpop.f32.mrf.mxu0
        %v1654 = vadd.f32 %v1430, %v1653
        %v1655 = vpop.f32.mrf.mxu0
        %1656 = vmatprep.mubr.f32.mxu0 %v1325
        %1657 = vmatmul.mubr.f32.gmra.mxu0 %v1324
        %v1658 = vpop.f32.mrf.mxu0
        %v1659 = vadd.f32 %v1435, %v1658
        %v1660 = vpop.f32.mrf.mxu0
        %1661 = vmatprep.mubr.f32.mxu0 %v1327
        %1662 = vmatmul.mubr.f32.gmra.mxu0 %v1326
        %v1663 = vpop.f32.mrf.mxu0
        %v1664 = vadd.f32 %v1440, %v1663
        %v1665 = vpop.f32.mrf.mxu0
        %1666 = vmatprep.mubr.f32.mxu0 %v1329
        %1667 = vmatmul.mubr.f32.gmra.mxu0 %v1328
        %v1668 = vpop.f32.mrf.mxu0
        %v1669 = vadd.f32 %v1445, %v1668
        %v1670 = vpop.f32.mrf.mxu0
        %1671 = vmatprep.mubr.f32.mxu0 %v1331
        %1672 = vmatmul.mubr.f32.gmra.mxu0 %v1330
        %v1673 = vpop.f32.mrf.mxu0
        %v1674 = vadd.f32 %v1450, %v1673
        %v1675 = vpop.f32.mrf.mxu0
        %1676 = vmatprep.mubr.f32.mxu0 %v1333
        %1677 = vmatmul.mubr.f32.gmra.mxu0 %v1332
        %v1678 = vpop.f32.mrf.mxu0
        %v1679 = vadd.f32 %v1455, %v1678
        %v1680 = vpop.f32.mrf.mxu0
        %1681 = vmatprep.mubr.f32.mxu0 %v1335
        %1682 = vmatmul.mubr.f32.gmra.mxu0 %v1334
        %v1683 = vpop.f32.mrf.mxu0
        %v1684 = vadd.f32 %v1460, %v1683
        %v1685 = vpop.f32.mrf.mxu0
        %1686 = vmatprep.mubr.f32.mxu0 %v1337
        %1687 = vmatmul.mubr.f32.gmra.mxu0 %v1336
        %v1688 = vpop.f32.mrf.mxu0
        %v1689 = vadd.f32 %v1465, %v1688
        %v1690 = vpop.f32.mrf.mxu0
        %1691 = vmatprep.mubr.f32.mxu0 %v1339
        %1692 = vmatmul.mubr.f32.gmra.mxu0 %v1338
        %v1693 = vpop.f32.mrf.mxu0
        %v1694 = vadd.f32 %v1470, %v1693
        %v1695 = vpop.f32.mrf.mxu0
        %1696 = vmatprep.mubr.f32.mxu0 %v1341
        %1697 = vmatmul.mubr.f32.gmra.mxu0 %v1340
        %v1698 = vpop.f32.mrf.mxu0
        %v1699 = vadd.f32 %v1475, %v1698
        %v1700 = vpop.f32.mrf.mxu0
        %1701 = vmatprep.mubr.f32.mxu0 %v1343
        %1702 = vmatmul.mubr.f32.gmra.mxu0 %v1342
        %v1703 = vpop.f32.mrf.mxu0
        %v1704 = vadd.f32 %v1480, %v1703
        %v1705 = vpop.f32.mrf.mxu0
        %1706 = vmatprep.mubr.f32.mxu0 %v1345
        %1707 = vmatmul.mubr.f32.gmra.mxu0 %v1344
        %v1708 = vpop.f32.mrf.mxu0
        %v1709 = vadd.f32 %v1485, %v1708
        %v1710 = vpop.f32.mrf.mxu0
        %1711 = vmatprep.mubr.f32.mxu0 %v1347
        %1712 = vmatmul.mubr.f32.gmra.mxu0 %v1346
        %v1713 = vpop.f32.mrf.mxu0
        %v1714 = vadd.f32 %v1490, %v1713
        %v1715 = vpop.f32.mrf.mxu0
        %1716 = vmatprep.mubr.f32.mxu0 %v1349
        %1717 = vmatmul.mubr.f32.gmra.mxu0 %v1348
        %v1718 = vpop.f32.mrf.mxu0
        %v1719 = vadd.f32 %v1495, %v1718
        %v1720 = vpop.f32.mrf.mxu0
        %1721 = vmatprep.mubr.f32.mxu0 %v1351
        %1722 = vmatmul.mubr.f32.gmra.mxu0 %v1350
        %v1723 = vpop.f32.mrf.mxu0
        %v1724 = vadd.f32 %v1500, %v1723
        %v1725 = vpop.f32.mrf.mxu0
        %1726 = vmatprep.mubr.f32.mxu0 %v1353
        %1727 = vmatmul.mubr.f32.gmra.mxu0 %v1352
        %v1728 = vpop.f32.mrf.mxu0
        %v1729 = vadd.f32 %v1505, %v1728
        %v1730 = vpop.f32.mrf.mxu0
        %1731 = vmatprep.mubr.f32.mxu0 %v1355
        %1732 = vmatmul.mubr.f32.gmra.mxu0 %v1354
        %v1733 = vpop.f32.mrf.mxu0
        %v1734 = vadd.f32 %v1510, %v1733
        %v1735 = vpop.f32.mrf.mxu0
        %1736 = vmatprep.mubr.f32.mxu0 %v1357
        %1737 = vmatmul.mubr.f32.gmra.mxu0 %v1356
        %v1738 = vpop.f32.mrf.mxu0
        %v1739 = vadd.f32 %v1515, %v1738
        %v1740 = vpop.f32.mrf.mxu0
        %1741 = vmatprep.mubr.f32.mxu0 %v1359
        %1742 = vmatmul.mubr.f32.gmra.mxu0 %v1358
        %v1743 = vpop.f32.mrf.mxu0
        %v1744 = vadd.f32 %v1520, %v1743
        %v1745 = vpop.f32.mrf.mxu0
        %1746 = vmatprep.mubr.f32.mxu0 %v1361
        %1747 = vmatmul.mubr.f32.gmra.mxu0 %v1360
        %v1748 = vpop.f32.mrf.mxu0
        %v1749 = vadd.f32 %v1525, %v1748
        %v1750 = vpop.f32.mrf.mxu0
        %1751 = vmatprep.mubr.f32.mxu0 %v1363
        %1752 = vmatmul.mubr.f32.gmra.mxu0 %v1362
        %v1753 = vpop.f32.mrf.mxu0
        %v1754 = vadd.f32 %v1530, %v1753
        %v1755 = vpop.f32.mrf.mxu0
        %1756 = vmatprep.mubr.f32.mxu0 %v1365
        %1757 = vmatmul.mubr.f32.gmra.mxu0 %v1364
        %v1758 = vpop.f32.mrf.mxu0
        %v1759 = vadd.f32 %v1535, %v1758
        %v1760 = vpop.f32.mrf.mxu0
        %1761 = vmatprep.mubr.f32.mxu0 %v1367
        %1762 = vmatmul.mubr.f32.gmra.mxu0 %v1366
        %v1763 = vpop.f32.mrf.mxu0
        %v1764 = vadd.f32 %v1540, %v1763
        %v1765 = vpop.f32.mrf.mxu0
        %1766 = vmatprep.mubr.f32.mxu0 %v1369
        %1767 = vmatmul.mubr.f32.gmra.mxu0 %v1368
        %v1768 = vpop.f32.mrf.mxu0
        %v1769 = vadd.f32 %v1545, %v1768
        %v1770 = vpop.f32.mrf.mxu0
        %1771 = vmatprep.mubr.f32.mxu0 %v1371
        %1772 = vmatmul.mubr.f32.gmra.mxu0 %v1370
        %v1773 = vpop.f32.mrf.mxu0
        %v1774 = vadd.f32 %v1550, %v1773
        %v1775 = vpop.f32.mrf.mxu0
        %1776 = vmatprep.mubr.f32.mxu0 %v1373
        %1777 = vmatmul.mubr.f32.gmra.mxu0 %v1372
        %v1778 = vpop.f32.mrf.mxu0
        %v1779 = vadd.f32 %v1555, %v1778
        %v1780 = vpop.f32.mrf.mxu0
        %1781 = vmatprep.mubr.f32.mxu0 %v1375
        %1782 = vmatmul.mubr.f32.gmra.mxu0 %v1374
        %v1783 = vpop.f32.mrf.mxu0
        %v1784 = vadd.f32 %v1560, %v1783
        %v1785 = vpop.f32.mrf.mxu0
        %1786 = vmatprep.mubr.f32.mxu0 %v1377
        %1787 = vmatmul.mubr.f32.gmra.mxu0 %v1376
        %v1788 = vpop.f32.mrf.mxu0
        %v1789 = vadd.f32 %v1565, %v1788
        %v1790 = vpop.f32.mrf.mxu0
        %1791 = vmatprep.mubr.f32.mxu0 %v1379
        %1792 = vmatmul.mubr.f32.gmra.mxu0 %v1378
        %v1793 = vpop.f32.mrf.mxu0
        %v1794 = vadd.f32 %v1570, %v1793
        %v1795 = vpop.f32.mrf.mxu0
        %1796 = vdwg.mxu0
        %v1797 = vmax.f32 %v1639, 0.0
        %v1798 = vmax.f32 %v1644, 0.0
        %v1799 = vmax.f32 %v1649, 0.0
        %v1800 = vmax.f32 %v1654, 0.0
        %v1801 = vmax.f32 %v1659, 0.0
        %v1802 = vmax.f32 %v1664, 0.0
        %v1803 = vmax.f32 %v1669, 0.0
        %v1804 = vmax.f32 %v1674, 0.0
        %v1805 = vmax.f32 %v1679, 0.0
        %v1806 = vmax.f32 %v1684, 0.0
        %v1807 = vmax.f32 %v1689, 0.0
        %v1808 = vmax.f32 %v1694, 0.0
        %v1809 = vmax.f32 %v1699, 0.0
        %v1810 = vmax.f32 %v1704, 0.0
        %v1811 = vmax.f32 %v1709, 0.0
        %v1812 = vmax.f32 %v1714, 0.0
        %v1813 = vmax.f32 %v1719, 0.0
        %v1814 = vmax.f32 %v1724, 0.0
        %v1815 = vmax.f32 %v1729, 0.0
        %v1816 = vmax.f32 %v1734, 0.0
        %v1817 = vmax.f32 %v1739, 0.0
        %v1818 = vmax.f32 %v1744, 0.0
        %v1819 = vmax.f32 %v1749, 0.0
        %v1820 = vmax.f32 %v1754, 0.0
        %v1821 = vmax.f32 %v1759, 0.0
        %v1822 = vmax.f32 %v1764, 0.0
        %v1823 = vmax.f32 %v1769, 0.0
        %v1824 = vmax.f32 %v1774, 0.0
        %v1825 = vmax.f32 %v1779, 0.0
        %v1826 = vmax.f32 %v1784, 0.0
        %v1827 = vmax.f32 %v1789, 0.0
        %v1828 = vmax.f32 %v1794, 0.0
        %v1829 = vld [vmem:[%s7] sm:$0xff]
        %v1830 = vld [vmem:[%s7 + $0x8] sm:$0xff]
        %v1831 = vld [vmem:[%s7 + $0x10] sm:$0xff]
        %v1832 = vld [vmem:[%s7 + $0x18] sm:$0xff]
        %v1833 = vld [vmem:[%s7 + $0x20] sm:$0xff]
        %v1834 = vld [vmem:[%s7 + $0x28] sm:$0xff]
        %v1835 = vld [vmem:[%s7 + $0x30] sm:$0xff]
        %v1836 = vld [vmem:[%s7 + $0x38] sm:$0xff]
        %v1837 = vld [vmem:[%s7 + $0x40] sm:$0xff]
        %v1838 = vld [vmem:[%s7 + $0x48] sm:$0xff]
        %v1839 = vld [vmem:[%s7 + $0x50] sm:$0xff]
        %v1840 = vld [vmem:[%s7 + $0x58] sm:$0xff]
        %v1841 = vld [vmem:[%s7 + $0x60] sm:$0xff]
        %v1842 = vld [vmem:[%s7 + $0x68] sm:$0xff]
        %v1843 = vld [vmem:[%s7 + $0x70] sm:$0xff]
        %v1844 = vld [vmem:[%s7 + $0x78] sm:$0xff]
        %v1845 = vld [vmem:[%s7 + $0x80] sm:$0xff]
        %v1846 = vld [vmem:[%s7 + $0x88] sm:$0xff]
        %v1847 = vld [vmem:[%s7 + $0x90] sm:$0xff]
        %v1848 = vld [vmem:[%s7 + $0x98] sm:$0xff]
        %v1849 = vld [vmem:[%s7 + $0xa0] sm:$0xff]
        %v1850 = vld [vmem:[%s7 + $0xa8] sm:$0xff]
        %v1851 = vld [vmem:[%s7 + $0xb0] sm:$0xff]
        %v1852 = vld [vmem:[%s7 + $0xb8] sm:$0xff]
        %v1853 = vld [vmem:[%s7 + $0xc0] sm:$0xff]
        %v1854 = vld [vmem:[%s7 + $0xc8] sm:$0xff]
        %v1855 = vld [vmem:[%s7 + $0xd0] sm:$0xff]
        %v1856 = vld [vmem:[%s7 + $0xd8] sm:$0xff]
        %v1857 = vld [vmem:[%s7 + $0xe0] sm:$0xff]
        %v1858 = vld [vmem:[%s7 + $0xe8] sm:$0xff]
        %v1859 = vld [vmem:[%s7 + $0xf0] sm:$0xff]
        %v1860 = vld [vmem:[%s7 + $0xf8] sm:$0xff]
        %1862 = vset.pattern.permute.xlu0 0
        %1863 = vperm.xlu0 %1862, %v1829
        %v1864 = vpop.permute.xlu0 %1863
        %1867 = vset.pattern.permute.xlu0 0
        %1868 = vperm.xlu0 %1867, %v1830
        %v1869 = vpop.permute.xlu0 %1868
        %1872 = vset.pattern.permute.xlu0 0
        %1873 = vperm.xlu0 %1872, %v1831
        %v1874 = vpop.permute.xlu0 %1873
        %1877 = vset.pattern.permute.xlu0 0
        %1878 = vperm.xlu0 %1877, %v1832
        %v1879 = vpop.permute.xlu0 %1878
        %1882 = vset.pattern.permute.xlu0 0
        %1883 = vperm.xlu0 %1882, %v1833
        %v1884 = vpop.permute.xlu0 %1883
        %1887 = vset.pattern.permute.xlu0 0
        %1888 = vperm.xlu0 %1887, %v1834
        %v1889 = vpop.permute.xlu0 %1888
        %1892 = vset.pattern.permute.xlu0 0
        %1893 = vperm.xlu0 %1892, %v1835
        %v1894 = vpop.permute.xlu0 %1893
        %1897 = vset.pattern.permute.xlu0 0
        %1898 = vperm.xlu0 %1897, %v1836
        %v1899 = vpop.permute.xlu0 %1898
        %1902 = vset.pattern.permute.xlu0 0
        %1903 = vperm.xlu0 %1902, %v1837
        %v1904 = vpop.permute.xlu0 %1903
        %1907 = vset.pattern.permute.xlu0 0
        %1908 = vperm.xlu0 %1907, %v1838
        %v1909 = vpop.permute.xlu0 %1908
        %1912 = vset.pattern.permute.xlu0 0
        %1913 = vperm.xlu0 %1912, %v1839
        %v1914 = vpop.permute.xlu0 %1913
        %1917 = vset.pattern.permute.xlu0 0
        %1918 = vperm.xlu0 %1917, %v1840
        %v1919 = vpop.permute.xlu0 %1918
        %1922 = vset.pattern.permute.xlu0 0
        %1923 = vperm.xlu0 %1922, %v1841
        %v1924 = vpop.permute.xlu0 %1923
        %1927 = vset.pattern.permute.xlu0 0
        %1928 = vperm.xlu0 %1927, %v1842
        %v1929 = vpop.permute.xlu0 %1928
        %1932 = vset.pattern.permute.xlu0 0
        %1933 = vperm.xlu0 %1932, %v1843
        %v1934 = vpop.permute.xlu0 %1933
        %1937 = vset.pattern.permute.xlu0 0
        %1938 = vperm.xlu0 %1937, %v1844
        %v1939 = vpop.permute.xlu0 %1938
        %1942 = vset.pattern.permute.xlu0 0
        %1943 = vperm.xlu0 %1942, %v1845
        %v1944 = vpop.permute.xlu0 %1943
        %1947 = vset.pattern.permute.xlu0 0
        %1948 = vperm.xlu0 %1947, %v1846
        %v1949 = vpop.permute.xlu0 %1948
        %1952 = vset.pattern.permute.xlu0 0
        %1953 = vperm.xlu0 %1952, %v1847
        %v1954 = vpop.permute.xlu0 %1953
        %1957 = vset.pattern.permute.xlu0 0
        %1958 = vperm.xlu0 %1957, %v1848
        %v1959 = vpop.permute.xlu0 %1958
        %1962 = vset.pattern.permute.xlu0 0
        %1963 = vperm.xlu0 %1962, %v1849
        %v1964 = vpop.permute.xlu0 %1963
        %1967 = vset.pattern.permute.xlu0 0
        %1968 = vperm.xlu0 %1967, %v1850
        %v1969 = vpop.permute.xlu0 %1968
        %1972 = vset.pattern.permute.xlu0 0
        %1973 = vperm.xlu0 %1972, %v1851
        %v1974 = vpop.permute.xlu0 %1973
        %1977 = vset.pattern.permute.xlu0 0
        %1978 = vperm.xlu0 %1977, %v1852
        %v1979 = vpop.permute.xlu0 %1978
        %1982 = vset.pattern.permute.xlu0 0
        %1983 = vperm.xlu0 %1982, %v1853
        %v1984 = vpop.permute.xlu0 %1983
        %1987 = vset.pattern.permute.xlu0 0
        %1988 = vperm.xlu0 %1987, %v1854
        %v1989 = vpop.permute.xlu0 %1988
        %1992 = vset.pattern.permute.xlu0 0
        %1993 = vperm.xlu0 %1992, %v1855
        %v1994 = vpop.permute.xlu0 %1993
        %1997 = vset.pattern.permute.xlu0 0
        %1998 = vperm.xlu0 %1997, %v1856
        %v1999 = vpop.permute.xlu0 %1998
        %2002 = vset.pattern.permute.xlu0 0
        %2003 = vperm.xlu0 %2002, %v1857
        %v2004 = vpop.permute.xlu0 %2003
        %2007 = vset.pattern.permute.xlu0 0
        %2008 = vperm.xlu0 %2007, %v1858
        %v2009 = vpop.permute.xlu0 %2008
        %2012 = vset.pattern.permute.xlu0 0
        %2013 = vperm.xlu0 %2012, %v1859
        %v2014 = vpop.permute.xlu0 %2013
        %2017 = vset.pattern.permute.xlu0 0
        %2018 = vperm.xlu0 %2017, %v1860
        %v2019 = vpop.permute.xlu0 %2018
        %v2021 = vmul.f32 %v1864, %v1797
        %v2022 = vmul.f32 %v1869, %v1798
        %v2023 = vmul.f32 %v1874, %v1799
        %v2024 = vmul.f32 %v1879, %v1800
        %v2025 = vmul.f32 %v1884, %v1801
        %v2026 = vmul.f32 %v1889, %v1802
        %v2027 = vmul.f32 %v1894, %v1803
        %v2028 = vmul.f32 %v1899, %v1804
        %v2029 = vmul.f32 %v1904, %v1805
        %v2030 = vmul.f32 %v1909, %v1806
        %v2031 = vmul.f32 %v1914, %v1807
        %v2032 = vmul.f32 %v1919, %v1808
        %v2033 = vmul.f32 %v1924, %v1809
        %v2034 = vmul.f32 %v1929, %v1810
        %v2035 = vmul.f32 %v1934, %v1811
        %v2036 = vmul.f32 %v1939, %v1812
        %v2037 = vmul.f32 %v1944, %v1813
        %v2038 = vmul.f32 %v1949, %v1814
        %v2039 = vmul.f32 %v1954, %v1815
        %v2040 = vmul.f32 %v1959, %v1816
        %v2041 = vmul.f32 %v1964, %v1817
        %v2042 = vmul.f32 %v1969, %v1818
        %v2043 = vmul.f32 %v1974, %v1819
        %v2044 = vmul.f32 %v1979, %v1820
        %v2045 = vmul.f32 %v1984, %v1821
        %v2046 = vmul.f32 %v1989, %v1822
        %v2047 = vmul.f32 %v1994, %v1823
        %v2048 = vmul.f32 %v1999, %v1824
        %v2049 = vmul.f32 %v2004, %v1825
        %v2050 = vmul.f32 %v2009, %v1826
        %v2051 = vmul.f32 %v2014, %v1827
        %v2052 = vmul.f32 %v2019, %v1828
        %v2053 = vadd.f32 %v2021, %v2022
        %v2054 = vadd.f32 %v2053, %v2023
        %v2055 = vadd.f32 %v2054, %v2024
        %v2056 = vadd.f32 %v2055, %v2025
        %v2057 = vadd.f32 %v2056, %v2026
        %v2058 = vadd.f32 %v2057, %v2027
        %v2059 = vadd.f32 %v2058, %v2028
        %v2060 = vadd.f32 %v2059, %v2029
        %v2061 = vadd.f32 %v2060, %v2030
        %v2062 = vadd.f32 %v2061, %v2031
        %v2063 = vadd.f32 %v2062, %v2032
        %v2064 = vadd.f32 %v2063, %v2033
        %v2065 = vadd.f32 %v2064, %v2034
        %v2066 = vadd.f32 %v2065, %v2035
        %v2067 = vadd.f32 %v2066, %v2036
        %v2068 = vadd.f32 %v2067, %v2037
        %v2069 = vadd.f32 %v2068, %v2038
        %v2070 = vadd.f32 %v2069, %v2039
        %v2071 = vadd.f32 %v2070, %v2040
        %v2072 = vadd.f32 %v2071, %v2041
        %v2073 = vadd.f32 %v2072, %v2042
        %v2074 = vadd.f32 %v2073, %v2043
        %v2075 = vadd.f32 %v2074, %v2044
        %v2076 = vadd.f32 %v2075, %v2045
        %v2077 = vadd.f32 %v2076, %v2046
        %v2078 = vadd.f32 %v2077, %v2047
        %v2079 = vadd.f32 %v2078, %v2048
        %v2080 = vadd.f32 %v2079, %v2049
        %v2081 = vadd.f32 %v2080, %v2050
        %v2082 = vadd.f32 %v2081, %v2051
        %v2083 = vadd.f32 %v2082, %v2052
        %v2084 = vrot.slane %v2083, 4
        %v2085 = vadd.f32 %v2083, %v2084
        %v2086 = vrot.slane %v2085, 2
        %v2087 = vadd.f32 %v2085, %v2086
        %v2088 = vrot.slane %v2087, 1
        %v2089 = vadd.f32 %v2087, %v2088
        %s2090 = sld [smem:[#allocation2]]
        %v2091 = vstv %s2090
        %v2092 = vadd.f32 %v2089, %v2091
        %2093 = vst [vmem:[%s334] sm:$0x1] %v2092
        %s2094 = sand.u32 %s231, 1
        %s2095 = scalar_lea.sflag [#allocation4], %s2094
        %s2096 = sand.u32 %s231, 1
        %s2097 = scalar_lea.vmem [#allocation3], %s2096
        // Predicated region
        $region57: #{q_forward.1} parent=55 // pred_check
          %p2098 = pneg %p241
        $region58: #{q_forward.1} parent=55 // pred_check_branch
          %2100 = sbr.rel (%p2098) target = $region60
        $region59: #{q_forward.1} parent=55 // pred_region
          %s2102 = ssub.s32 16, 16
          %2103 = vsyncadd %s2095, %s2102
          %s2104 = smul.addr %s24, 16
          %s2105 = scalar_lea.hbm %s9, %s2104
          %s2107 = sshll.u32 %s2097, 4
          %s2108 = int_to_ptr.vmem [resolvable:$true] %s2107
          %2110 = dma.vmem_to_hbm [thread:$0]  %s2108, 16, %s2105, %s2095
        $region60: #{q_forward.1} parent=55 // pred_fallthru
          _
      $region56: #{q_forward.1} parent=5 // pred_fallthru
        _
      %p2111 = scmp.le.s32.totalorder 2, %s19
      // Predicated region
      $region61: #{q_forward.1} parent=5 // pred_check
        %p2112 = pneg %p2111
      $region62: #{q_forward.1} parent=5 // pred_check_branch
        %2114 = sbr.rel (%p2112) target = $region64
      $region63: #{q_forward.1} parent=5 // pred_region
        %s2115 = ssub.s32 %s19, 2
        // Predicated region
        $region65: #{q_forward.1} parent=63 // pred_check
          %p2116 = pneg %p247
        $region66: #{q_forward.1} parent=63 // pred_check_branch
          %2118 = sbr.rel (%p2116) target = $region68
        $region67: #{q_forward.1} parent=63 // pred_region
          %s2119 = sand.u32 %s232, 1
          %s2120 = scalar_lea.sflag [#allocation4], %s2119
          %s2121 = sand.u32 %s232, 1
          %s2122 = scalar_lea.vmem [#allocation3], %s2121
          %2123 = dma.done %s2120, 16
        $region68: #{q_forward.1} parent=63 // pred_fallthru
          _
      $region64: #{q_forward.1} parent=5 // pred_fallthru
        _
    $region6: #{q_forward.1} parent=1 // loop_footer
      %s23 = sadd.s32 1, %s19
    $region7: #{q_forward.1} parent=1 // loop_footer_branch
      %18 = sbr.rel target = $region3
    $region8: #{q_forward.1} parent=1 // loop_exit
      _
    %2124 = vsyncpa [#allocation4], 1
    %s2125 = scalar_lea.sflag [#allocation4], 1
    %2126 = vsyncpa %s2125, 1

</llo_original>
